<compile_context>
chip_gen: v6e
topology: v6e:2x2x1
jax: 0.10.0
libtpu: 0.0.40
codegen_flags: <defaults>
</compile_context>

<pallas_src>
import functools

import jax
import jax.numpy as jnp
from jax.experimental import pallas as pl
from jax.experimental.pallas import tpu as pltpu


# ----------------------------- Pallas kernel --------------------------------
def _vae_kernel(
    # inputs
    x_ref, eps_ref,
    # encoder params
    w1, b1, w2, b2, wms, bms,
    # prior-branch params (no matmuls needed; see notes above)
    bh1, wmp, bmp, wsp, bsp,
    # decoder params
    wd1, bd1, wd2, bd2, wheads, bheads,
    # fused output slab
    out_ref,
    *, original_dim, latent_dim, nf_lognorm, out_width,
):
    def lin(h, w_ref, b_ref):
        return jnp.dot(h, w_ref[...], preferred_element_type=jnp.float32) + b_ref[...]

    def isrlu(v):  # InverseSquareRootLinearUnit
        return 1.0 + 5e-3 + jnp.where(v > 0.0, v, v * jax.lax.rsqrt(1.0 + v * v))

    x = x_ref[...]
    tb = x.shape[0]

    # ---- encoder: Linear -> ReLU -> Linear -> ReLU ----
    h = jnp.maximum(lin(x, w1, b1), 0.0)
    h = jnp.maximum(lin(h, w2, b2), 0.0)

    # ---- fused mu|sigma head: one matmul of width 2*latent ----
    ms = lin(h, wms, bms)                       # (tb, 2*latent)
    mu = ms[:, :latent_dim]
    sigma = isrlu(ms[:, latent_dim:])

    # ---- prior branch (pure VPU, zero MXU pushes) ----
    # SmashTo0(x) == 0 exactly  =>  h1_prior(0) == bias broadcast.
    h1p = jnp.broadcast_to(bh1[...], (tb, 1))             # (tb, 1)
    mu_prior = h1p * wmp[...] + bmp[...]                   # (tb, latent)
    sigma_prior = isrlu(h1p * wsp[...] + bsp[...])         # (tb, latent)

    # ---- reparameterization: z = mu + eps * sigma ----
    z = mu + eps_ref[...] * sigma

    # ---- decoder: Dec1 -> ReLU -> Linear -> ReLU ----
    d = jnp.maximum(lin(z, wd1, bd1), 0.0)
    d = jnp.maximum(lin(d, wd2, bd2), 0.0)

    # ---- fused decoder heads: one matmul -> per-lane activation select ----
    heads = lin(d, wheads, bheads)              # (tb, orig + 2*nf_lognorm)
    col = jax.lax.broadcasted_iota(jnp.int32, heads.shape, 1)
    heads_isrlu = isrlu(heads)
    heads_ctanh = 0.5 * (1.0 + 0.999 * jnp.tanh(heads))    # ClippedTanh
    heads_act = jnp.where(
        col < original_dim, heads,                          # par1: identity
        jnp.where(col < original_dim + nf_lognorm,
                  heads_isrlu,                              # par2: ISRLU
                  heads_ctanh))                             # par3: ClippedTanh

    # ---- single lane-dense 128-wide output slab ----
    pad_w = out_width - (heads.shape[1] + 4 * latent_dim)
    pad = jnp.zeros((tb, pad_w), jnp.float32)
    out_ref[...] = jnp.concatenate(
        [heads_act, mu, sigma, mu_prior, sigma_prior, pad], axis=1)


# ------------------------------ wrapper --------------------------------------
def vae_forward(x, eps, params, *, nf_lognorm, latent_dim, batch_tile=None):
    """Run the fused VAE forward Pallas kernel.

    x:   (B, original_dim) float32
    eps: (B, latent_dim)   float32  (the torch.randn_like noise)
    params: dict of weight/bias arrays (weights are (in, out), biases (1, out))
    Returns ((par1, par2, par3), mu, sigma, mu_prior, sigma_prior)
    """
    B, original_dim = x.shape
    heads_width = original_dim + 2 * nf_lognorm
    total_width = heads_width + 4 * latent_dim
    out_width = max(128, -(-total_width // 128) * 128)     # lane-dense slab

    # ---- batch tile selection: multiple of 8, >=2 grid steps (v7x 2 TCs),
    #      capped so double-buffered I/O comfortably fits scoped VMEM ----
    if batch_tile is None:
        tb = B
        if B >= 16 and B % 16 == 0:
            tb = B // 2
        max_tb = 4096
        while tb > max_tb and tb % 16 == 0:
            tb //= 2
    else:
        tb = batch_tile
    assert B % tb == 0, "batch_tile must divide B"
    assert tb % 8 == 0 or tb == B, "batch_tile must be a multiple of 8 sublanes"
    grid = (B // tb,)

    # ---- fuse small heads into single wide matmuls (wrapper-side packing) ----
    wms = jnp.concatenate([params["wmu"], params["wsig"]], axis=1)
    bms = jnp.concatenate([params["bmu"], params["bsig"]], axis=1)
    wheads = jnp.concatenate([params["wp1"], params["wp2"], params["wp3"]], axis=1)
    bheads = jnp.concatenate([params["bp1"], params["bp2"], params["bp3"]], axis=1)

    param_arrays = [
        params["w1"], params["b1"], params["w2"], params["b2"], wms, bms,
        params["bh1"], params["wmp"], params["bmp"], params["wsp"], params["bsp"],
        params["wd1"], params["bd1"], params["wd2"], params["bd2"], wheads, bheads,
    ]

    def batch_spec(feat):
        return pl.BlockSpec((tb, feat), lambda i: (i, 0))

    def full_spec(arr):
        # constant index_map -> block stays VMEM-resident across grid steps
        return pl.BlockSpec(arr.shape, lambda i: (0, 0))

    in_specs = [batch_spec(original_dim), batch_spec(latent_dim)]
    in_specs += [full_spec(a) for a in param_arrays]

    out_shape = jax.ShapeDtypeStruct((B, out_width), jnp.float32)
    out_spec = batch_spec(out_width)

    # VMEM budget: double-buffered x/eps/output tiles + params + headroom.
    per_step_bytes = 2 * 2 * tb * (original_dim + latent_dim + out_width) * 4
    vmem_limit = int(min(max(per_step_bytes + (4 << 20), 32 << 20), 96 << 20))

    kernel = functools.partial(
        _vae_kernel,
        original_dim=original_dim,
        latent_dim=latent_dim,
        nf_lognorm=nf_lognorm,
        out_width=out_width,
    )

    slab = pl.pallas_call(
        kernel,
        out_shape=out_shape,
        grid_spec=pltpu.PrefetchScalarGridSpec(
            num_scalar_prefetch=0,
            grid=grid,
            in_specs=in_specs,
            out_specs=out_spec,
        ),
        compiler_params=pltpu.CompilerParams(
            dimension_semantics=("parallel",),
            vmem_limit_bytes=vmem_limit,
        ),
    )(x, eps, *param_arrays)

    # ---- slice the lane-dense slab back into the 7 logical outputs ----
    o = 0
    par1 = slab[:, o:o + original_dim]; o += original_dim
    par2 = slab[:, o:o + nf_lognorm]; o += nf_lognorm
    par3 = slab[:, o:o + nf_lognorm]; o += nf_lognorm
    mu = slab[:, o:o + latent_dim]; o += latent_dim
    sigma = slab[:, o:o + latent_dim]; o += latent_dim
    mu_prior = slab[:, o:o + latent_dim]; o += latent_dim
    sigma_prior = slab[:, o:o + latent_dim]; o += latent_dim
    return (par1, par2, par3), mu, sigma, mu_prior, sigma_prior


# -------------------------- parameter construction ---------------------------
def init_params(key, original_dim, intermediate_dim, latent_dim, nf_lognorm):
    """Deterministic init mimicking PyTorch's Linear default (uniform +-1/sqrt(fan_in))."""
    def linear(key, fan_in, fan_out):
        kw, kb = jax.random.split(key)
        bound = 1.0 / (fan_in ** 0.5)
        w = jax.random.uniform(kw, (fan_in, fan_out), jnp.float32, -bound, bound)
        b = jax.random.uniform(kb, (1, fan_out), jnp.float32, -bound, bound)
        return w, b

    keys = jax.random.split(key, 10)
    p = {}
    p["w1"], p["b1"] = linear(keys[0], original_dim, intermediate_dim)
    p["w2"], p["b2"] = linear(keys[1], intermediate_dim, intermediate_dim)
    p["wmu"], p["bmu"] = linear(keys[2], intermediate_dim, latent_dim)
    p["wsig"], p["bsig"] = linear(keys[3], intermediate_dim, latent_dim)
    # frozen prior layers
    p["wh1"] = jnp.zeros((original_dim, 1), jnp.float32)
    p["bh1"] = jnp.ones((1, 1), jnp.float32)
    p["wmp"] = jnp.zeros((1, latent_dim), jnp.float32)
    p["bmp"] = jnp.zeros((1, latent_dim), jnp.float32)
    p["wsp"] = jnp.zeros((1, latent_dim), jnp.float32)
    p["bsp"] = jnp.ones((1, latent_dim), jnp.float32)
    # decoder
    p["wd1"], p["bd1"] = linear(keys[4], latent_dim, intermediate_dim)
    p["wd2"], p["bd2"] = linear(keys[5], intermediate_dim, intermediate_dim)
    p["wp1"], p["bp1"] = linear(keys[6], intermediate_dim, original_dim)
    p["wp2"], p["bp2"] = linear(keys[7], intermediate_dim, nf_lognorm)
    p["wp3"], p["bp3"] = linear(keys[8], intermediate_dim, nf_lognorm)
    return p


# ------------------------------ reference ------------------------------------
def vae_reference(x, eps, p):
    """Plain-JAX reference of the same forward pass for validation."""
    def isrlu(v):
        return 1.0 + 5e-3 + jnp.where(v > 0.0, v, v / jnp.sqrt(1.0 + v * v))

    h = jnp.maximum(x @ p["w1"] + p["b1"], 0.0)
    h = jnp.maximum(h @ p["w2"] + p["b2"], 0.0)
    mu = h @ p["wmu"] + p["bmu"]
    sigma = isrlu(h @ p["wsig"] + p["bsig"])
    fixed = x * 0.0
    h1p = fixed @ p["wh1"] + p["bh1"]
    mu_prior = h1p @ p["wmp"] + p["bmp"]
    sigma_prior = isrlu(h1p @ p["wsp"] + p["bsp"])
    z = mu + eps * sigma
    d = jnp.maximum(z @ p["wd1"] + p["bd1"], 0.0)
    d = jnp.maximum(d @ p["wd2"] + p["bd2"], 0.0)
    par1 = d @ p["wp1"] + p["bp1"]
    par2 = isrlu(d @ p["wp2"] + p["bp2"])
    par3 = 0.5 * (1.0 + 0.999 * jnp.tanh(d @ p["wp3"] + p["bp3"]))
    return (par1, par2, par3), mu, sigma, mu_prior, sigma_prior


# ------------------------------- main -----------------------------------------
if __name__ == "__main__":
    # Shapes consistent with the module: original_dim = Nf_lognorm + 2*Nf_binomial
    B = 256                     # multiple of 16 -> grid of 2 (uses both v7x TCs)
    nf_lognorm = 10
    nf_binomial = 3
    original_dim = nf_lognorm + 2 * nf_binomial  # 16
    intermediate_dim = 32
    latent_dim = 8

    key = jax.random.PRNGKey(0)
    kx, keps, kparams = jax.random.split(key, 3)
    x = jax.random.normal(kx, (B, original_dim), jnp.float32)
    eps = jax.random.normal(keps, (B, latent_dim), jnp.float32)  # torch.randn_like noise
    params = init_params(kparams, original_dim, intermediate_dim, latent_dim, nf_lognorm)

    out = vae_forward(x, eps, params, nf_lognorm=nf_lognorm, latent_dim=latent_dim)
    out = jax.block_until_ready(out)

    ref = vae_reference(x, eps, params)
    flat_out = jax.tree_util.tree_leaves(out)
    flat_ref = jax.tree_util.tree_leaves(ref)
    for a, b in zip(flat_out, flat_ref):
        assert a.shape == b.shape and a.dtype == b.dtype
        assert jnp.max(jnp.abs(a - b)) < 1e-4, "mismatch vs reference"

    # TODO(synk): optional bf16 I/O (x/eps/output slab) on v6e/v7x to halve HBM
    # traffic at large batch; kept f32 here for exact parity with the reference.
    print("KERNEL_OK")
</pallas_src>

<mosaic_0001>
module attributes {stable_mosaic.version = 11 : i64} {
  func.func @_vae_kernel(%arg0: i32, %arg1: memref<128x16xf32, #tpu.memory_space<vmem>>, %arg2: memref<128x8xf32, #tpu.memory_space<vmem>>, %arg3: memref<16x32xf32, #tpu.memory_space<vmem>>, %arg4: memref<1x32xf32, #tpu.memory_space<vmem>>, %arg5: memref<32x32xf32, #tpu.memory_space<vmem>>, %arg6: memref<1x32xf32, #tpu.memory_space<vmem>>, %arg7: memref<32x16xf32, #tpu.memory_space<vmem>>, %arg8: memref<1x16xf32, #tpu.memory_space<vmem>>, %arg9: memref<1x1xf32, #tpu.memory_space<vmem>>, %arg10: memref<1x8xf32, #tpu.memory_space<vmem>>, %arg11: memref<1x8xf32, #tpu.memory_space<vmem>>, %arg12: memref<1x8xf32, #tpu.memory_space<vmem>>, %arg13: memref<1x8xf32, #tpu.memory_space<vmem>>, %arg14: memref<8x32xf32, #tpu.memory_space<vmem>>, %arg15: memref<1x32xf32, #tpu.memory_space<vmem>>, %arg16: memref<32x32xf32, #tpu.memory_space<vmem>>, %arg17: memref<1x32xf32, #tpu.memory_space<vmem>>, %arg18: memref<32x36xf32, #tpu.memory_space<vmem>>, %arg19: memref<1x36xf32, #tpu.memory_space<vmem>>, %arg20: memref<128x128xf32, #tpu.memory_space<vmem>>) attributes {dimension_semantics = [#tpu.dimension_semantics<parallel>], iteration_bounds = array<i64: 2>, scalar_prefetch = 0 : i64, scratch_operands = 0 : i64, tpu.core_type = #tpu.core_type<tc>, window_params = [{transform_indices = @transform_0, window_bounds = array<i64: 128, 16>}, {transform_indices = @transform_1, window_bounds = array<i64: 128, 8>}, {pipeline_mode = #tpu.pipeline_mode<synchronous>, transform_indices = @transform_2, window_bounds = array<i64: 16, 32>}, {pipeline_mode = #tpu.pipeline_mode<synchronous>, transform_indices = @transform_3, window_bounds = array<i64: 1, 32>}, {pipeline_mode = #tpu.pipeline_mode<synchronous>, transform_indices = @transform_4, window_bounds = array<i64: 32, 32>}, {pipeline_mode = #tpu.pipeline_mode<synchronous>, transform_indices = @transform_5, window_bounds = array<i64: 1, 32>}, {pipeline_mode = #tpu.pipeline_mode<synchronous>, transform_indices = @transform_6, window_bounds = array<i64: 32, 16>}, {pipeline_mode = #tpu.pipeline_mode<synchronous>, transform_indices = @transform_7, window_bounds = array<i64: 1, 16>}, {pipeline_mode = #tpu.pipeline_mode<synchronous>, transform_indices = @transform_8, window_bounds = array<i64: 1, 1>}, {pipeline_mode = #tpu.pipeline_mode<synchronous>, transform_indices = @transform_9, window_bounds = array<i64: 1, 8>}, {pipeline_mode = #tpu.pipeline_mode<synchronous>, transform_indices = @transform_10, window_bounds = array<i64: 1, 8>}, {pipeline_mode = #tpu.pipeline_mode<synchronous>, transform_indices = @transform_11, window_bounds = array<i64: 1, 8>}, {pipeline_mode = #tpu.pipeline_mode<synchronous>, transform_indices = @transform_12, window_bounds = array<i64: 1, 8>}, {pipeline_mode = #tpu.pipeline_mode<synchronous>, transform_indices = @transform_13, window_bounds = array<i64: 8, 32>}, {pipeline_mode = #tpu.pipeline_mode<synchronous>, transform_indices = @transform_14, window_bounds = array<i64: 1, 32>}, {pipeline_mode = #tpu.pipeline_mode<synchronous>, transform_indices = @transform_15, window_bounds = array<i64: 32, 32>}, {pipeline_mode = #tpu.pipeline_mode<synchronous>, transform_indices = @transform_16, window_bounds = array<i64: 1, 32>}, {pipeline_mode = #tpu.pipeline_mode<synchronous>, transform_indices = @transform_17, window_bounds = array<i64: 32, 36>}, {pipeline_mode = #tpu.pipeline_mode<synchronous>, transform_indices = @transform_18, window_bounds = array<i64: 1, 36>}, {transform_indices = @transform_19, window_bounds = array<i64: 128, 128>}]} {
    %c0 = arith.constant 0 : index
    %c0_0 = arith.constant 0 : index
    %0 = vector.load %arg1[%c0, %c0_0] : memref<128x16xf32, #tpu.memory_space<vmem>>, vector<128x16xf32>
    %c0_1 = arith.constant 0 : index
    %c0_2 = arith.constant 0 : index
    %1 = vector.load %arg3[%c0_1, %c0_2] : memref<16x32xf32, #tpu.memory_space<vmem>>, vector<16x32xf32>
    %cst = arith.constant dense<0.000000e+00> : vector<128x32xf32>
    %2 = tpu.matmul %0, %1, %cst {dimension_numbers = #tpu.dot_dimension_numbers<[1], [0], [0], [1], [0, 0, 1, 1], [], []>} : vector<128x16xf32>, vector<16x32xf32>, vector<128x32xf32> -> vector<128x32xf32>
    %c0_3 = arith.constant 0 : index
    %c0_4 = arith.constant 0 : index
    %3 = vector.load %arg4[%c0_3, %c0_4] : memref<1x32xf32, #tpu.memory_space<vmem>>, vector<1x32xf32>
    %4 = vector.broadcast %3 : vector<1x32xf32> to vector<128x32xf32>
    %5 = arith.addf %2, %4 : vector<128x32xf32>
    %cst_5 = arith.constant 0.000000e+00 : f32
    %6 = vector.broadcast %cst_5 : f32 to vector<128x32xf32>
    %7 = arith.maximumf %5, %6 : vector<128x32xf32>
    %c0_6 = arith.constant 0 : index
    %c0_7 = arith.constant 0 : index
    %8 = vector.load %arg5[%c0_6, %c0_7] : memref<32x32xf32, #tpu.memory_space<vmem>>, vector<32x32xf32>
    %cst_8 = arith.constant dense<0.000000e+00> : vector<128x32xf32>
    %9 = tpu.matmul %7, %8, %cst_8 {dimension_numbers = #tpu.dot_dimension_numbers<[1], [0], [0], [1], [0, 0, 1, 1], [], []>} : vector<128x32xf32>, vector<32x32xf32>, vector<128x32xf32> -> vector<128x32xf32>
    %c0_9 = arith.constant 0 : index
    %c0_10 = arith.constant 0 : index
    %10 = vector.load %arg6[%c0_9, %c0_10] : memref<1x32xf32, #tpu.memory_space<vmem>>, vector<1x32xf32>
    %11 = vector.broadcast %10 : vector<1x32xf32> to vector<128x32xf32>
    %12 = arith.addf %9, %11 : vector<128x32xf32>
    %cst_11 = arith.constant 0.000000e+00 : f32
    %13 = vector.broadcast %cst_11 : f32 to vector<128x32xf32>
    %14 = arith.maximumf %12, %13 : vector<128x32xf32>
    %c0_12 = arith.constant 0 : index
    %c0_13 = arith.constant 0 : index
    %15 = vector.load %arg7[%c0_12, %c0_13] : memref<32x16xf32, #tpu.memory_space<vmem>>, vector<32x16xf32>
    %cst_14 = arith.constant dense<0.000000e+00> : vector<128x16xf32>
    %16 = tpu.matmul %14, %15, %cst_14 {dimension_numbers = #tpu.dot_dimension_numbers<[1], [0], [0], [1], [0, 0, 1, 1], [], []>} : vector<128x32xf32>, vector<32x16xf32>, vector<128x16xf32> -> vector<128x16xf32>
    %c0_15 = arith.constant 0 : index
    %c0_16 = arith.constant 0 : index
    %17 = vector.load %arg8[%c0_15, %c0_16] : memref<1x16xf32, #tpu.memory_space<vmem>>, vector<1x16xf32>
    %18 = vector.broadcast %17 : vector<1x16xf32> to vector<128x16xf32>
    %19 = arith.addf %16, %18 : vector<128x16xf32>
    %20 = vector.extract_strided_slice %19 {offsets = [0, 0], sizes = [128, 8], strides = [1, 1]} : vector<128x16xf32> to vector<128x8xf32>
    %21 = vector.extract_strided_slice %19 {offsets = [0, 8], sizes = [128, 8], strides = [1, 1]} : vector<128x16xf32> to vector<128x8xf32>
    %cst_17 = arith.constant 0.000000e+00 : f32
    %22 = vector.broadcast %cst_17 : f32 to vector<128x8xf32>
    %23 = arith.cmpf ogt, %21, %22 : vector<128x8xf32>
    %24 = arith.mulf %21, %21 : vector<128x8xf32>
    %cst_18 = arith.constant 1.000000e+00 : f32
    %25 = vector.broadcast %cst_18 : f32 to vector<128x8xf32>
    %26 = arith.addf %25, %24 : vector<128x8xf32>
    %27 = math.rsqrt %26 : vector<128x8xf32>
    %28 = arith.mulf %21, %27 : vector<128x8xf32>
    %29 = arith.select %23, %21, %28 : vector<128x8xi1>, vector<128x8xf32>
    %cst_19 = arith.constant 1.005000e+00 : f32
    %30 = vector.broadcast %cst_19 : f32 to vector<128x8xf32>
    %31 = arith.addf %30, %29 : vector<128x8xf32>
    %c0_20 = arith.constant 0 : index
    %c0_21 = arith.constant 0 : index
    %32 = vector.load %arg9[%c0_20, %c0_21] : memref<1x1xf32, #tpu.memory_space<vmem>>, vector<1x1xf32>
    %33 = vector.shape_cast %32 : vector<1x1xf32> to vector<1x1xf32>
    %34 = vector.broadcast %33 : vector<1x1xf32> to vector<128x1xf32>
    %c0_22 = arith.constant 0 : index
    %c0_23 = arith.constant 0 : index
    %35 = vector.load %arg10[%c0_22, %c0_23] : memref<1x8xf32, #tpu.memory_space<vmem>>, vector<1x8xf32>
    %36 = vector.broadcast %34 : vector<128x1xf32> to vector<128x8xf32>
    %37 = vector.broadcast %35 : vector<1x8xf32> to vector<128x8xf32>
    %38 = arith.mulf %36, %37 : vector<128x8xf32>
    %c0_24 = arith.constant 0 : index
    %c0_25 = arith.constant 0 : index
    %39 = vector.load %arg11[%c0_24, %c0_25] : memref<1x8xf32, #tpu.memory_space<vmem>>, vector<1x8xf32>
    %40 = vector.broadcast %39 : vector<1x8xf32> to vector<128x8xf32>
    %41 = arith.addf %38, %40 : vector<128x8xf32>
    %c0_26 = arith.constant 0 : index
    %c0_27 = arith.constant 0 : index
    %42 = vector.load %arg12[%c0_26, %c0_27] : memref<1x8xf32, #tpu.memory_space<vmem>>, vector<1x8xf32>
    %43 = vector.broadcast %34 : vector<128x1xf32> to vector<128x8xf32>
    %44 = vector.broadcast %42 : vector<1x8xf32> to vector<128x8xf32>
    %45 = arith.mulf %43, %44 : vector<128x8xf32>
    %c0_28 = arith.constant 0 : index
    %c0_29 = arith.constant 0 : index
    %46 = vector.load %arg13[%c0_28, %c0_29] : memref<1x8xf32, #tpu.memory_space<vmem>>, vector<1x8xf32>
    %47 = vector.broadcast %46 : vector<1x8xf32> to vector<128x8xf32>
    %48 = arith.addf %45, %47 : vector<128x8xf32>
    %cst_30 = arith.constant 0.000000e+00 : f32
    %49 = vector.broadcast %cst_30 : f32 to vector<128x8xf32>
    %50 = arith.cmpf ogt, %48, %49 : vector<128x8xf32>
    %51 = arith.mulf %48, %48 : vector<128x8xf32>
    %cst_31 = arith.constant 1.000000e+00 : f32
    %52 = vector.broadcast %cst_31 : f32 to vector<128x8xf32>
    %53 = arith.addf %52, %51 : vector<128x8xf32>
    %54 = math.rsqrt %53 : vector<128x8xf32>
    %55 = arith.mulf %48, %54 : vector<128x8xf32>
    %56 = arith.select %50, %48, %55 : vector<128x8xi1>, vector<128x8xf32>
    %cst_32 = arith.constant 1.005000e+00 : f32
    %57 = vector.broadcast %cst_32 : f32 to vector<128x8xf32>
    %58 = arith.addf %57, %56 : vector<128x8xf32>
    %c0_33 = arith.constant 0 : index
    %c0_34 = arith.constant 0 : index
    %59 = vector.load %arg2[%c0_33, %c0_34] : memref<128x8xf32, #tpu.memory_space<vmem>>, vector<128x8xf32>
    %60 = arith.mulf %59, %31 : vector<128x8xf32>
    %61 = arith.addf %20, %60 : vector<128x8xf32>
    %c0_35 = arith.constant 0 : index
    %c0_36 = arith.constant 0 : index
    %62 = vector.load %arg14[%c0_35, %c0_36] : memref<8x32xf32, #tpu.memory_space<vmem>>, vector<8x32xf32>
    %cst_37 = arith.constant dense<0.000000e+00> : vector<128x32xf32>
    %63 = tpu.matmul %61, %62, %cst_37 {dimension_numbers = #tpu.dot_dimension_numbers<[1], [0], [0], [1], [0, 0, 1, 1], [], []>} : vector<128x8xf32>, vector<8x32xf32>, vector<128x32xf32> -> vector<128x32xf32>
    %c0_38 = arith.constant 0 : index
    %c0_39 = arith.constant 0 : index
    %64 = vector.load %arg15[%c0_38, %c0_39] : memref<1x32xf32, #tpu.memory_space<vmem>>, vector<1x32xf32>
    %65 = vector.broadcast %64 : vector<1x32xf32> to vector<128x32xf32>
    %66 = arith.addf %63, %65 : vector<128x32xf32>
    %cst_40 = arith.constant 0.000000e+00 : f32
    %67 = vector.broadcast %cst_40 : f32 to vector<128x32xf32>
    %68 = arith.maximumf %66, %67 : vector<128x32xf32>
    %c0_41 = arith.constant 0 : index
    %c0_42 = arith.constant 0 : index
    %69 = vector.load %arg16[%c0_41, %c0_42] : memref<32x32xf32, #tpu.memory_space<vmem>>, vector<32x32xf32>
    %cst_43 = arith.constant dense<0.000000e+00> : vector<128x32xf32>
    %70 = tpu.matmul %68, %69, %cst_43 {dimension_numbers = #tpu.dot_dimension_numbers<[1], [0], [0], [1], [0, 0, 1, 1], [], []>} : vector<128x32xf32>, vector<32x32xf32>, vector<128x32xf32> -> vector<128x32xf32>
    %c0_44 = arith.constant 0 : index
    %c0_45 = arith.constant 0 : index
    %71 = vector.load %arg17[%c0_44, %c0_45] : memref<1x32xf32, #tpu.memory_space<vmem>>, vector<1x32xf32>
    %72 = vector.broadcast %71 : vector<1x32xf32> to vector<128x32xf32>
    %73 = arith.addf %70, %72 : vector<128x32xf32>
    %cst_46 = arith.constant 0.000000e+00 : f32
    %74 = vector.broadcast %cst_46 : f32 to vector<128x32xf32>
    %75 = arith.maximumf %73, %74 : vector<128x32xf32>
    %c0_47 = arith.constant 0 : index
    %c0_48 = arith.constant 0 : index
    %76 = vector.load %arg18[%c0_47, %c0_48] : memref<32x36xf32, #tpu.memory_space<vmem>>, vector<32x36xf32>
    %cst_49 = arith.constant dense<0.000000e+00> : vector<128x36xf32>
    %77 = tpu.matmul %75, %76, %cst_49 {dimension_numbers = #tpu.dot_dimension_numbers<[1], [0], [0], [1], [0, 0, 1, 1], [], []>} : vector<128x32xf32>, vector<32x36xf32>, vector<128x36xf32> -> vector<128x36xf32>
    %c0_50 = arith.constant 0 : index
    %c0_51 = arith.constant 0 : index
    %78 = vector.load %arg19[%c0_50, %c0_51] : memref<1x36xf32, #tpu.memory_space<vmem>>, vector<1x36xf32>
    %79 = vector.broadcast %78 : vector<1x36xf32> to vector<128x36xf32>
    %80 = arith.addf %77, %79 : vector<128x36xf32>
    %81 = tpu.iota {dimensions = array<i32: 1>} : vector<128x36xi32>
    %cst_52 = arith.constant 0.000000e+00 : f32
    %82 = vector.broadcast %cst_52 : f32 to vector<128x36xf32>
    %83 = arith.cmpf ogt, %80, %82 : vector<128x36xf32>
    %84 = arith.mulf %80, %80 : vector<128x36xf32>
    %cst_53 = arith.constant 1.000000e+00 : f32
    %85 = vector.broadcast %cst_53 : f32 to vector<128x36xf32>
    %86 = arith.addf %85, %84 : vector<128x36xf32>
    %87 = math.rsqrt %86 : vector<128x36xf32>
    %88 = arith.mulf %80, %87 : vector<128x36xf32>
    %89 = arith.select %83, %80, %88 : vector<128x36xi1>, vector<128x36xf32>
    %cst_54 = arith.constant 1.005000e+00 : f32
    %90 = vector.broadcast %cst_54 : f32 to vector<128x36xf32>
    %91 = arith.addf %90, %89 : vector<128x36xf32>
    %92 = math.tanh %80 : vector<128x36xf32>
    %cst_55 = arith.constant 9.990000e-01 : f32
    %93 = vector.broadcast %cst_55 : f32 to vector<128x36xf32>
    %94 = arith.mulf %93, %92 : vector<128x36xf32>
    %cst_56 = arith.constant 1.000000e+00 : f32
    %95 = vector.broadcast %cst_56 : f32 to vector<128x36xf32>
    %96 = arith.addf %95, %94 : vector<128x36xf32>
    %cst_57 = arith.constant 5.000000e-01 : f32
    %97 = vector.broadcast %cst_57 : f32 to vector<128x36xf32>
    %98 = arith.mulf %97, %96 : vector<128x36xf32>
    %c16_i32 = arith.constant 16 : i32
    %99 = vector.broadcast %c16_i32 : i32 to vector<128x36xi32>
    %100 = arith.cmpi slt, %81, %99 : vector<128x36xi32>
    %c26_i32 = arith.constant 26 : i32
    %101 = vector.broadcast %c26_i32 : i32 to vector<128x36xi32>
    %102 = arith.cmpi slt, %81, %101 : vector<128x36xi32>
    %103 = arith.select %102, %91, %98 : vector<128x36xi1>, vector<128x36xf32>
    %104 = arith.select %100, %80, %103 : vector<128x36xi1>, vector<128x36xf32>
    %cst_58 = arith.constant 0.000000e+00 : f32
    %105 = vector.broadcast %cst_58 : f32 to vector<128x60xf32>
    %106 = tpu.concatenate %104, %20, %31, %41, %58, %105 in 1 : vector<128x36xf32>, vector<128x8xf32>, vector<128x8xf32>, vector<128x8xf32>, vector<128x8xf32>, vector<128x60xf32> -> vector<128x128xf32>
    %c0_59 = arith.constant 0 : index
    %c0_60 = arith.constant 0 : index
    %107 = vector.load %arg20[%c0_59, %c0_60] : memref<128x128xf32, #tpu.memory_space<vmem>>, vector<128x128xf32>
    tpu.vector_store %arg20[%c0_59, %c0_60], %106 {strides = array<i32>} : memref<128x128xf32, #tpu.memory_space<vmem>>, vector<128x128xf32>,
    return
  }
  func.func @transform_0(%arg0: i32) -> (i32, i32) {
    %c0_i32 = arith.constant 0 : i32
    %c0_i32_0 = arith.constant 0 : i32
    return %arg0, %c0_i32 : i32, i32
  }
  func.func @transform_1(%arg0: i32) -> (i32, i32) {
    %c0_i32 = arith.constant 0 : i32
    %c0_i32_0 = arith.constant 0 : i32
    return %arg0, %c0_i32 : i32, i32
  }
  func.func @transform_2(%arg0: i32) -> (i32, i32) {
    %c0_i32 = arith.constant 0 : i32
    %c0_i32_0 = arith.constant 0 : i32
    %c0_i32_1 = arith.constant 0 : i32
    return %c0_i32, %c0_i32_0 : i32, i32
  }
  func.func @transform_3(%arg0: i32) -> (i32, i32) {
    %c0_i32 = arith.constant 0 : i32
    %c0_i32_0 = arith.constant 0 : i32
    %c0_i32_1 = arith.constant 0 : i32
    return %c0_i32, %c0_i32_0 : i32, i32
  }
  func.func @transform_4(%arg0: i32) -> (i32, i32) {
    %c0_i32 = arith.constant 0 : i32
    %c0_i32_0 = arith.constant 0 : i32
    %c0_i32_1 = arith.constant 0 : i32
    return %c0_i32, %c0_i32_0 : i32, i32
  }
  func.func @transform_5(%arg0: i32) -> (i32, i32) {
    %c0_i32 = arith.constant 0 : i32
    %c0_i32_0 = arith.constant 0 : i32
    %c0_i32_1 = arith.constant 0 : i32
    return %c0_i32, %c0_i32_0 : i32, i32
  }
  func.func @transform_6(%arg0: i32) -> (i32, i32) {
    %c0_i32 = arith.constant 0 : i32
    %c0_i32_0 = arith.constant 0 : i32
    %c0_i32_1 = arith.constant 0 : i32
    return %c0_i32, %c0_i32_0 : i32, i32
  }
  func.func @transform_7(%arg0: i32) -> (i32, i32) {
    %c0_i32 = arith.constant 0 : i32
    %c0_i32_0 = arith.constant 0 : i32
    %c0_i32_1 = arith.constant 0 : i32
    return %c0_i32, %c0_i32_0 : i32, i32
  }
  func.func @transform_8(%arg0: i32) -> (i32, i32) {
    %c0_i32 = arith.constant 0 : i32
    %c0_i32_0 = arith.constant 0 : i32
    %c0_i32_1 = arith.constant 0 : i32
    return %c0_i32, %c0_i32_0 : i32, i32
  }
  func.func @transform_9(%arg0: i32) -> (i32, i32) {
    %c0_i32 = arith.constant 0 : i32
    %c0_i32_0 = arith.constant 0 : i32
    %c0_i32_1 = arith.constant 0 : i32
    return %c0_i32, %c0_i32_0 : i32, i32
  }
  func.func @transform_10(%arg0: i32) -> (i32, i32) {
    %c0_i32 = arith.constant 0 : i32
    %c0_i32_0 = arith.constant 0 : i32
    %c0_i32_1 = arith.constant 0 : i32
    return %c0_i32, %c0_i32_0 : i32, i32
  }
  func.func @transform_11(%arg0: i32) -> (i32, i32) {
    %c0_i32 = arith.constant 0 : i32
    %c0_i32_0 = arith.constant 0 : i32
    %c0_i32_1 = arith.constant 0 : i32
    return %c0_i32, %c0_i32_0 : i32, i32
  }
  func.func @transform_12(%arg0: i32) -> (i32, i32) {
    %c0_i32 = arith.constant 0 : i32
    %c0_i32_0 = arith.constant 0 : i32
    %c0_i32_1 = arith.constant 0 : i32
    return %c0_i32, %c0_i32_0 : i32, i32
  }
  func.func @transform_13(%arg0: i32) -> (i32, i32) {
    %c0_i32 = arith.constant 0 : i32
    %c0_i32_0 = arith.constant 0 : i32
    %c0_i32_1 = arith.constant 0 : i32
    return %c0_i32, %c0_i32_0 : i32, i32
  }
  func.func @transform_14(%arg0: i32) -> (i32, i32) {
    %c0_i32 = arith.constant 0 : i32
    %c0_i32_0 = arith.constant 0 : i32
    %c0_i32_1 = arith.constant 0 : i32
    return %c0_i32, %c0_i32_0 : i32, i32
  }
  func.func @transform_15(%arg0: i32) -> (i32, i32) {
    %c0_i32 = arith.constant 0 : i32
    %c0_i32_0 = arith.constant 0 : i32
    %c0_i32_1 = arith.constant 0 : i32
    return %c0_i32, %c0_i32_0 : i32, i32
  }
  func.func @transform_16(%arg0: i32) -> (i32, i32) {
    %c0_i32 = arith.constant 0 : i32
    %c0_i32_0 = arith.constant 0 : i32
    %c0_i32_1 = arith.constant 0 : i32
    return %c0_i32, %c0_i32_0 : i32, i32
  }
  func.func @transform_17(%arg0: i32) -> (i32, i32) {
    %c0_i32 = arith.constant 0 : i32
    %c0_i32_0 = arith.constant 0 : i32
    %c0_i32_1 = arith.constant 0 : i32
    return %c0_i32, %c0_i32_0 : i32, i32
  }
  func.func @transform_18(%arg0: i32) -> (i32, i32) {
    %c0_i32 = arith.constant 0 : i32
    %c0_i32_0 = arith.constant 0 : i32
    %c0_i32_1 = arith.constant 0 : i32
    return %c0_i32, %c0_i32_0 : i32, i32
  }
  func.func @transform_19(%arg0: i32) -> (i32, i32) {
    %c0_i32 = arith.constant 0 : i32
    %c0_i32_0 = arith.constant 0 : i32
    return %arg0, %c0_i32 : i32, i32
  }
}

</mosaic_0001>

<llo_original>
// kernel: tpu_custom_call.1
$region0: #{tpu_custom_call.1}
  #allocation0 [shape = 'u32[]', space=smem, size = 0x4, offset = 0x4, fixed_abs, tag = 'smem constant byte address 0x4 - core index']
  #allocation1 [shape = 'u32[144,128]{1,0:T(1,128)}', space=vmem, size = 0x12000, scoped, tag = 'internal scratch']
  #allocation2 [shape = 'f32[1,1]{1,0:T(1,128)S(1)}', space=vmem, size = 0x200, scoped, tag = 'scoped memory for tpu_custom_call.1']
  %s0 = inlined_call_operand.vmem [shape: f32[256,16], index: 0, kind: input, shape index: {}]
  %s1 = inlined_call_operand.vmem [shape: f32[256,8], index: 1, kind: input, shape index: {}]
  %s2 = inlined_call_operand.vmem [shape: f32[16,32], index: 2, kind: input, shape index: {}]
  %s3 = inlined_call_operand.vmem [shape: f32[1,32], index: 3, kind: input, shape index: {}]
  %s4 = inlined_call_operand.vmem [shape: f32[32,32], index: 4, kind: input, shape index: {}]
  %s5 = inlined_call_operand.vmem [shape: f32[1,32], index: 5, kind: input, shape index: {}]
  %s6 = inlined_call_operand.vmem [shape: f32[32,16], index: 6, kind: input, shape index: {}]
  %s7 = inlined_call_operand.vmem [shape: f32[1,16], index: 7, kind: input, shape index: {}]
  %s8 = inlined_call_operand.<no memory space> [shape: f32[1,1], index: 8, kind: input, shape index: {}]
  %s9 = inlined_call_operand.vmem [shape: f32[1,8], index: 9, kind: input, shape index: {}]
  %s10 = inlined_call_operand.vmem [shape: f32[1,8], index: 10, kind: input, shape index: {}]
  %s11 = inlined_call_operand.vmem [shape: f32[1,8], index: 11, kind: input, shape index: {}]
  %s12 = inlined_call_operand.vmem [shape: f32[1,8], index: 12, kind: input, shape index: {}]
  %s13 = inlined_call_operand.vmem [shape: f32[8,32], index: 13, kind: input, shape index: {}]
  %s14 = inlined_call_operand.vmem [shape: f32[1,32], index: 14, kind: input, shape index: {}]
  %s15 = inlined_call_operand.vmem [shape: f32[32,32], index: 15, kind: input, shape index: {}]
  %s16 = inlined_call_operand.vmem [shape: f32[1,32], index: 16, kind: input, shape index: {}]
  %s17 = inlined_call_operand.vmem [shape: f32[32,36], index: 17, kind: input, shape index: {}]
  %s18 = inlined_call_operand.vmem [shape: f32[1,36], index: 18, kind: input, shape index: {}]
  %s19 = inlined_call_operand.hbm [shape: f32[256,128], index: 19, kind: output, shape index: {}]
  %s20 = sld [smem:[#allocation0]]
  $region109: #{tpu_custom_call.1} parent=0
    _
  %s22 = ssub.s32 1, %s20
  %s23 = scalar_select 0, %s22, %s20
  %v24 = vstv %s8
  %25 = vst [vmem:[#allocation2] sm:$0x1] %v24
  $region1: #{tpu_custom_call.1} parent=0
    #allocation3 [shape = 'u8[131072]{0}', space=vmem, size = 0x20000, scoped, tag = 'output window, operand 0']
    #allocation4 [shape = 's32[2]{0}', space=sflag, size = 0x8, scoped, tag = 'scoped memory for tpu_custom_call.1']
    %26 = vsyncpa [#allocation4], 0
    %s27 = scalar_lea.sflag [#allocation4], 1
    %28 = vsyncpa %s27, 0
    loop: start=0, step=1, limit=4
    $region2: #{tpu_custom_call.1} parent=1 // loop_pre_header
      _
    $region3: #{tpu_custom_call.1} parent=1 // loop_header
      %s30 = sphi 0, %s34
      %p31 = scmp.ge.s32.totalorder %s30, 4
      %s40 = sphi 0, %s42
      %s43 = sphi 0, %s40
      %s44 = sphi 0, %s43
      %s60 = sphi 0, %s44
      %s66 = sphi 0, %s68
      %s69 = sphi 0, %s66
      %s70 = sphi 0, %s69
      %s86 = sphi 0, %s70
      %s90 = sphi 0, %s90
      %s92 = sphi 0, %s90
      %s93 = sphi 0, %s92
      %s107 = sphi 0, %s93
      %s111 = sphi 0, %s111
      %s113 = sphi 0, %s111
      %s114 = sphi 0, %s113
      %s128 = sphi 0, %s114
      %s132 = sphi 0, %s132
      %s134 = sphi 0, %s132
      %s135 = sphi 0, %s134
      %s149 = sphi 0, %s135
      %s153 = sphi 0, %s153
      %s155 = sphi 0, %s153
      %s156 = sphi 0, %s155
      %s170 = sphi 0, %s156
      %s174 = sphi 0, %s174
      %s176 = sphi 0, %s174
      %s177 = sphi 0, %s176
      %s191 = sphi 0, %s177
      %s195 = sphi 0, %s195
      %s197 = sphi 0, %s195
      %s198 = sphi 0, %s197
      %s212 = sphi 0, %s198
      %s216 = sphi 0, %s216
      %s218 = sphi 0, %s216
      %s219 = sphi 0, %s218
      %s233 = sphi 0, %s219
      %s237 = sphi 0, %s237
      %s239 = sphi 0, %s237
      %s240 = sphi 0, %s239
      %s254 = sphi 0, %s240
      %s258 = sphi 0, %s258
      %s260 = sphi 0, %s258
      %s261 = sphi 0, %s260
      %s275 = sphi 0, %s261
      %s279 = sphi 0, %s279
      %s281 = sphi 0, %s279
      %s282 = sphi 0, %s281
      %s296 = sphi 0, %s282
      %s300 = sphi 0, %s300
      %s302 = sphi 0, %s300
      %s303 = sphi 0, %s302
      %s317 = sphi 0, %s303
      %s321 = sphi 0, %s321
      %s323 = sphi 0, %s321
      %s324 = sphi 0, %s323
      %s338 = sphi 0, %s324
      %s342 = sphi 0, %s342
      %s344 = sphi 0, %s342
      %s345 = sphi 0, %s344
      %s359 = sphi 0, %s345
      %s363 = sphi 0, %s363
      %s365 = sphi 0, %s363
      %s366 = sphi 0, %s365
      %s380 = sphi 0, %s366
      %s384 = sphi 0, %s384
      %s386 = sphi 0, %s384
      %s387 = sphi 0, %s386
      %s401 = sphi 0, %s387
      %s405 = sphi 0, %s405
      %s407 = sphi 0, %s405
      %s408 = sphi 0, %s407
      %s422 = sphi 0, %s408
      %s426 = sphi 0, %s426
      %s428 = sphi 0, %s426
      %s429 = sphi 0, %s428
      %s443 = sphi 0, %s429
      %s449 = sphi 0, %s451
      %s452 = sphi 0, %s449
      %s453 = sphi 0, %s452
      %s469 = sphi 0, %s453
    $region4: #{tpu_custom_call.1} parent=1 // loop_header_branch
      %33 = sbr.rel (%p31) target = $region8
    $region5: #{tpu_custom_call.1} parent=1 // loop_body
      %s35 = ssub.s32 %s30, 1
      %s36 = ssub.s32 %s30, 2
      %s37 = sadd.s32 %s30, 1
      %s38 = ssub.s32 %s30, %s37
      %p39 = scmp.eq.s32.totalorder %s38, 0
      %s41 = sadd.s32 %s40, 1
      %s42 = scalar_select %p39, %s40, %s41
      %p45 = pneg %p39
      %p46 = scmp.eq.s32.totalorder %s30, 1
      %p47 = por %p45, %p46
      %p48 = scmp.ne.s32.totalorder %s40, %s43
      %p49 = scmp.eq.s32.totalorder %s30, 0
      %p50 = por %p48, %p49
      %p51 = scmp.ne.s32.totalorder %s40, %s43
      %p52 = scmp.eq.s32.totalorder %s35, 1
      %p53 = por %p51, %p52
      %p54 = scmp.ne.s32.totalorder %s43, %s44
      %p55 = scmp.eq.s32.totalorder %s35, 0
      %p56 = por %p54, %p55
      %p57 = scmp.ne.s32.totalorder %s43, %s44
      %p58 = scmp.eq.s32.totalorder %s36, 1
      %p59 = por %p57, %p58
      %p61 = scmp.ne.s32.totalorder %s44, %s60
      %p62 = scmp.eq.s32.totalorder %s36, 0
      %p63 = por %p61, %p62
      %s64 = ssub.s32 %s30, %s37
      %p65 = scmp.eq.s32.totalorder %s64, 0
      %s67 = sadd.s32 %s66, 1
      %s68 = scalar_select %p65, %s66, %s67
      %p71 = pneg %p65
      %p72 = scmp.eq.s32.totalorder %s30, 1
      %p73 = por %p71, %p72
      %p74 = scmp.ne.s32.totalorder %s66, %s69
      %p75 = scmp.eq.s32.totalorder %s30, 0
      %p76 = por %p74, %p75
      %p77 = scmp.ne.s32.totalorder %s66, %s69
      %p78 = scmp.eq.s32.totalorder %s35, 1
      %p79 = por %p77, %p78
      %p80 = scmp.ne.s32.totalorder %s69, %s70
      %p81 = scmp.eq.s32.totalorder %s35, 0
      %p82 = por %p80, %p81
      %p83 = scmp.ne.s32.totalorder %s69, %s70
      %p84 = scmp.eq.s32.totalorder %s36, 1
      %p85 = por %p83, %p84
      %p87 = scmp.ne.s32.totalorder %s70, %s86
      %p88 = scmp.eq.s32.totalorder %s36, 0
      %p89 = por %p87, %p88
      %s91 = sadd.s32 %s90, 1
      %p94 = scmp.eq.s32.totalorder %s30, 1
      %p95 = scmp.ne.s32.totalorder %s90, %s92
      %p96 = scmp.eq.s32.totalorder %s30, 0
      %p97 = por %p95, %p96
      %p98 = scmp.ne.s32.totalorder %s90, %s92
      %p99 = scmp.eq.s32.totalorder %s35, 1
      %p100 = por %p98, %p99
      %p101 = scmp.ne.s32.totalorder %s92, %s93
      %p102 = scmp.eq.s32.totalorder %s35, 0
      %p103 = por %p101, %p102
      %p104 = scmp.ne.s32.totalorder %s92, %s93
      %p105 = scmp.eq.s32.totalorder %s36, 1
      %p106 = por %p104, %p105
      %p108 = scmp.ne.s32.totalorder %s93, %s107
      %p109 = scmp.eq.s32.totalorder %s36, 0
      %p110 = por %p108, %p109
      %s112 = sadd.s32 %s111, 1
      %p115 = scmp.eq.s32.totalorder %s30, 1
      %p116 = scmp.ne.s32.totalorder %s111, %s113
      %p117 = scmp.eq.s32.totalorder %s30, 0
      %p118 = por %p116, %p117
      %p119 = scmp.ne.s32.totalorder %s111, %s113
      %p120 = scmp.eq.s32.totalorder %s35, 1
      %p121 = por %p119, %p120
      %p122 = scmp.ne.s32.totalorder %s113, %s114
      %p123 = scmp.eq.s32.totalorder %s35, 0
      %p124 = por %p122, %p123
      %p125 = scmp.ne.s32.totalorder %s113, %s114
      %p126 = scmp.eq.s32.totalorder %s36, 1
      %p127 = por %p125, %p126
      %p129 = scmp.ne.s32.totalorder %s114, %s128
      %p130 = scmp.eq.s32.totalorder %s36, 0
      %p131 = por %p129, %p130
      %s133 = sadd.s32 %s132, 1
      %p136 = scmp.eq.s32.totalorder %s30, 1
      %p137 = scmp.ne.s32.totalorder %s132, %s134
      %p138 = scmp.eq.s32.totalorder %s30, 0
      %p139 = por %p137, %p138
      %p140 = scmp.ne.s32.totalorder %s132, %s134
      %p141 = scmp.eq.s32.totalorder %s35, 1
      %p142 = por %p140, %p141
      %p143 = scmp.ne.s32.totalorder %s134, %s135
      %p144 = scmp.eq.s32.totalorder %s35, 0
      %p145 = por %p143, %p144
      %p146 = scmp.ne.s32.totalorder %s134, %s135
      %p147 = scmp.eq.s32.totalorder %s36, 1
      %p148 = por %p146, %p147
      %p150 = scmp.ne.s32.totalorder %s135, %s149
      %p151 = scmp.eq.s32.totalorder %s36, 0
      %p152 = por %p150, %p151
      %s154 = sadd.s32 %s153, 1
      %p157 = scmp.eq.s32.totalorder %s30, 1
      %p158 = scmp.ne.s32.totalorder %s153, %s155
      %p159 = scmp.eq.s32.totalorder %s30, 0
      %p160 = por %p158, %p159
      %p161 = scmp.ne.s32.totalorder %s153, %s155
      %p162 = scmp.eq.s32.totalorder %s35, 1
      %p163 = por %p161, %p162
      %p164 = scmp.ne.s32.totalorder %s155, %s156
      %p165 = scmp.eq.s32.totalorder %s35, 0
      %p166 = por %p164, %p165
      %p167 = scmp.ne.s32.totalorder %s155, %s156
      %p168 = scmp.eq.s32.totalorder %s36, 1
      %p169 = por %p167, %p168
      %p171 = scmp.ne.s32.totalorder %s156, %s170
      %p172 = scmp.eq.s32.totalorder %s36, 0
      %p173 = por %p171, %p172
      %s175 = sadd.s32 %s174, 1
      %p178 = scmp.eq.s32.totalorder %s30, 1
      %p179 = scmp.ne.s32.totalorder %s174, %s176
      %p180 = scmp.eq.s32.totalorder %s30, 0
      %p181 = por %p179, %p180
      %p182 = scmp.ne.s32.totalorder %s174, %s176
      %p183 = scmp.eq.s32.totalorder %s35, 1
      %p184 = por %p182, %p183
      %p185 = scmp.ne.s32.totalorder %s176, %s177
      %p186 = scmp.eq.s32.totalorder %s35, 0
      %p187 = por %p185, %p186
      %p188 = scmp.ne.s32.totalorder %s176, %s177
      %p189 = scmp.eq.s32.totalorder %s36, 1
      %p190 = por %p188, %p189
      %p192 = scmp.ne.s32.totalorder %s177, %s191
      %p193 = scmp.eq.s32.totalorder %s36, 0
      %p194 = por %p192, %p193
      %s196 = sadd.s32 %s195, 1
      %p199 = scmp.eq.s32.totalorder %s30, 1
      %p200 = scmp.ne.s32.totalorder %s195, %s197
      %p201 = scmp.eq.s32.totalorder %s30, 0
      %p202 = por %p200, %p201
      %p203 = scmp.ne.s32.totalorder %s195, %s197
      %p204 = scmp.eq.s32.totalorder %s35, 1
      %p205 = por %p203, %p204
      %p206 = scmp.ne.s32.totalorder %s197, %s198
      %p207 = scmp.eq.s32.totalorder %s35, 0
      %p208 = por %p206, %p207
      %p209 = scmp.ne.s32.totalorder %s197, %s198
      %p210 = scmp.eq.s32.totalorder %s36, 1
      %p211 = por %p209, %p210
      %p213 = scmp.ne.s32.totalorder %s198, %s212
      %p214 = scmp.eq.s32.totalorder %s36, 0
      %p215 = por %p213, %p214
      %s217 = sadd.s32 %s216, 1
      %p220 = scmp.eq.s32.totalorder %s30, 1
      %p221 = scmp.ne.s32.totalorder %s216, %s218
      %p222 = scmp.eq.s32.totalorder %s30, 0
      %p223 = por %p221, %p222
      %p224 = scmp.ne.s32.totalorder %s216, %s218
      %p225 = scmp.eq.s32.totalorder %s35, 1
      %p226 = por %p224, %p225
      %p227 = scmp.ne.s32.totalorder %s218, %s219
      %p228 = scmp.eq.s32.totalorder %s35, 0
      %p229 = por %p227, %p228
      %p230 = scmp.ne.s32.totalorder %s218, %s219
      %p231 = scmp.eq.s32.totalorder %s36, 1
      %p232 = por %p230, %p231
      %p234 = scmp.ne.s32.totalorder %s219, %s233
      %p235 = scmp.eq.s32.totalorder %s36, 0
      %p236 = por %p234, %p235
      %s238 = sadd.s32 %s237, 1
      %p241 = scmp.eq.s32.totalorder %s30, 1
      %p242 = scmp.ne.s32.totalorder %s237, %s239
      %p243 = scmp.eq.s32.totalorder %s30, 0
      %p244 = por %p242, %p243
      %p245 = scmp.ne.s32.totalorder %s237, %s239
      %p246 = scmp.eq.s32.totalorder %s35, 1
      %p247 = por %p245, %p246
      %p248 = scmp.ne.s32.totalorder %s239, %s240
      %p249 = scmp.eq.s32.totalorder %s35, 0
      %p250 = por %p248, %p249
      %p251 = scmp.ne.s32.totalorder %s239, %s240
      %p252 = scmp.eq.s32.totalorder %s36, 1
      %p253 = por %p251, %p252
      %p255 = scmp.ne.s32.totalorder %s240, %s254
      %p256 = scmp.eq.s32.totalorder %s36, 0
      %p257 = por %p255, %p256
      %s259 = sadd.s32 %s258, 1
      %p262 = scmp.eq.s32.totalorder %s30, 1
      %p263 = scmp.ne.s32.totalorder %s258, %s260
      %p264 = scmp.eq.s32.totalorder %s30, 0
      %p265 = por %p263, %p264
      %p266 = scmp.ne.s32.totalorder %s258, %s260
      %p267 = scmp.eq.s32.totalorder %s35, 1
      %p268 = por %p266, %p267
      %p269 = scmp.ne.s32.totalorder %s260, %s261
      %p270 = scmp.eq.s32.totalorder %s35, 0
      %p271 = por %p269, %p270
      %p272 = scmp.ne.s32.totalorder %s260, %s261
      %p273 = scmp.eq.s32.totalorder %s36, 1
      %p274 = por %p272, %p273
      %p276 = scmp.ne.s32.totalorder %s261, %s275
      %p277 = scmp.eq.s32.totalorder %s36, 0
      %p278 = por %p276, %p277
      %s280 = sadd.s32 %s279, 1
      %p283 = scmp.eq.s32.totalorder %s30, 1
      %p284 = scmp.ne.s32.totalorder %s279, %s281
      %p285 = scmp.eq.s32.totalorder %s30, 0
      %p286 = por %p284, %p285
      %p287 = scmp.ne.s32.totalorder %s279, %s281
      %p288 = scmp.eq.s32.totalorder %s35, 1
      %p289 = por %p287, %p288
      %p290 = scmp.ne.s32.totalorder %s281, %s282
      %p291 = scmp.eq.s32.totalorder %s35, 0
      %p292 = por %p290, %p291
      %p293 = scmp.ne.s32.totalorder %s281, %s282
      %p294 = scmp.eq.s32.totalorder %s36, 1
      %p295 = por %p293, %p294
      %p297 = scmp.ne.s32.totalorder %s282, %s296
      %p298 = scmp.eq.s32.totalorder %s36, 0
      %p299 = por %p297, %p298
      %s301 = sadd.s32 %s300, 1
      %p304 = scmp.eq.s32.totalorder %s30, 1
      %p305 = scmp.ne.s32.totalorder %s300, %s302
      %p306 = scmp.eq.s32.totalorder %s30, 0
      %p307 = por %p305, %p306
      %p308 = scmp.ne.s32.totalorder %s300, %s302
      %p309 = scmp.eq.s32.totalorder %s35, 1
      %p310 = por %p308, %p309
      %p311 = scmp.ne.s32.totalorder %s302, %s303
      %p312 = scmp.eq.s32.totalorder %s35, 0
      %p313 = por %p311, %p312
      %p314 = scmp.ne.s32.totalorder %s302, %s303
      %p315 = scmp.eq.s32.totalorder %s36, 1
      %p316 = por %p314, %p315
      %p318 = scmp.ne.s32.totalorder %s303, %s317
      %p319 = scmp.eq.s32.totalorder %s36, 0
      %p320 = por %p318, %p319
      %s322 = sadd.s32 %s321, 1
      %p325 = scmp.eq.s32.totalorder %s30, 1
      %p326 = scmp.ne.s32.totalorder %s321, %s323
      %p327 = scmp.eq.s32.totalorder %s30, 0
      %p328 = por %p326, %p327
      %p329 = scmp.ne.s32.totalorder %s321, %s323
      %p330 = scmp.eq.s32.totalorder %s35, 1
      %p331 = por %p329, %p330
      %p332 = scmp.ne.s32.totalorder %s323, %s324
      %p333 = scmp.eq.s32.totalorder %s35, 0
      %p334 = por %p332, %p333
      %p335 = scmp.ne.s32.totalorder %s323, %s324
      %p336 = scmp.eq.s32.totalorder %s36, 1
      %p337 = por %p335, %p336
      %p339 = scmp.ne.s32.totalorder %s324, %s338
      %p340 = scmp.eq.s32.totalorder %s36, 0
      %p341 = por %p339, %p340
      %s343 = sadd.s32 %s342, 1
      %p346 = scmp.eq.s32.totalorder %s30, 1
      %p347 = scmp.ne.s32.totalorder %s342, %s344
      %p348 = scmp.eq.s32.totalorder %s30, 0
      %p349 = por %p347, %p348
      %p350 = scmp.ne.s32.totalorder %s342, %s344
      %p351 = scmp.eq.s32.totalorder %s35, 1
      %p352 = por %p350, %p351
      %p353 = scmp.ne.s32.totalorder %s344, %s345
      %p354 = scmp.eq.s32.totalorder %s35, 0
      %p355 = por %p353, %p354
      %p356 = scmp.ne.s32.totalorder %s344, %s345
      %p357 = scmp.eq.s32.totalorder %s36, 1
      %p358 = por %p356, %p357
      %p360 = scmp.ne.s32.totalorder %s345, %s359
      %p361 = scmp.eq.s32.totalorder %s36, 0
      %p362 = por %p360, %p361
      %s364 = sadd.s32 %s363, 1
      %p367 = scmp.eq.s32.totalorder %s30, 1
      %p368 = scmp.ne.s32.totalorder %s363, %s365
      %p369 = scmp.eq.s32.totalorder %s30, 0
      %p370 = por %p368, %p369
      %p371 = scmp.ne.s32.totalorder %s363, %s365
      %p372 = scmp.eq.s32.totalorder %s35, 1
      %p373 = por %p371, %p372
      %p374 = scmp.ne.s32.totalorder %s365, %s366
      %p375 = scmp.eq.s32.totalorder %s35, 0
      %p376 = por %p374, %p375
      %p377 = scmp.ne.s32.totalorder %s365, %s366
      %p378 = scmp.eq.s32.totalorder %s36, 1
      %p379 = por %p377, %p378
      %p381 = scmp.ne.s32.totalorder %s366, %s380
      %p382 = scmp.eq.s32.totalorder %s36, 0
      %p383 = por %p381, %p382
      %s385 = sadd.s32 %s384, 1
      %p388 = scmp.eq.s32.totalorder %s30, 1
      %p389 = scmp.ne.s32.totalorder %s384, %s386
      %p390 = scmp.eq.s32.totalorder %s30, 0
      %p391 = por %p389, %p390
      %p392 = scmp.ne.s32.totalorder %s384, %s386
      %p393 = scmp.eq.s32.totalorder %s35, 1
      %p394 = por %p392, %p393
      %p395 = scmp.ne.s32.totalorder %s386, %s387
      %p396 = scmp.eq.s32.totalorder %s35, 0
      %p397 = por %p395, %p396
      %p398 = scmp.ne.s32.totalorder %s386, %s387
      %p399 = scmp.eq.s32.totalorder %s36, 1
      %p400 = por %p398, %p399
      %p402 = scmp.ne.s32.totalorder %s387, %s401
      %p403 = scmp.eq.s32.totalorder %s36, 0
      %p404 = por %p402, %p403
      %s406 = sadd.s32 %s405, 1
      %p409 = scmp.eq.s32.totalorder %s30, 1
      %p410 = scmp.ne.s32.totalorder %s405, %s407
      %p411 = scmp.eq.s32.totalorder %s30, 0
      %p412 = por %p410, %p411
      %p413 = scmp.ne.s32.totalorder %s405, %s407
      %p414 = scmp.eq.s32.totalorder %s35, 1
      %p415 = por %p413, %p414
      %p416 = scmp.ne.s32.totalorder %s407, %s408
      %p417 = scmp.eq.s32.totalorder %s35, 0
      %p418 = por %p416, %p417
      %p419 = scmp.ne.s32.totalorder %s407, %s408
      %p420 = scmp.eq.s32.totalorder %s36, 1
      %p421 = por %p419, %p420
      %p423 = scmp.ne.s32.totalorder %s408, %s422
      %p424 = scmp.eq.s32.totalorder %s36, 0
      %p425 = por %p423, %p424
      %s427 = sadd.s32 %s426, 1
      %p430 = scmp.eq.s32.totalorder %s30, 1
      %p431 = scmp.ne.s32.totalorder %s426, %s428
      %p432 = scmp.eq.s32.totalorder %s30, 0
      %p433 = por %p431, %p432
      %p434 = scmp.ne.s32.totalorder %s426, %s428
      %p435 = scmp.eq.s32.totalorder %s35, 1
      %p436 = por %p434, %p435
      %p437 = scmp.ne.s32.totalorder %s428, %s429
      %p438 = scmp.eq.s32.totalorder %s35, 0
      %p439 = por %p437, %p438
      %p440 = scmp.ne.s32.totalorder %s428, %s429
      %p441 = scmp.eq.s32.totalorder %s36, 1
      %p442 = por %p440, %p441
      %p444 = scmp.ne.s32.totalorder %s429, %s443
      %p445 = scmp.eq.s32.totalorder %s36, 0
      %p446 = por %p444, %p445
      %s447 = ssub.s32 %s30, %s37
      %p448 = scmp.eq.s32.totalorder %s447, 0
      %s450 = sadd.s32 %s449, 1
      %s451 = scalar_select %p448, %s449, %s450
      %p454 = pneg %p448
      %p455 = scmp.eq.s32.totalorder %s30, 1
      %p456 = por %p454, %p455
      %p457 = scmp.ne.s32.totalorder %s449, %s452
      %p458 = scmp.eq.s32.totalorder %s30, 0
      %p459 = por %p457, %p458
      %p460 = scmp.ne.s32.totalorder %s449, %s452
      %p461 = scmp.eq.s32.totalorder %s35, 1
      %p462 = por %p460, %p461
      %p463 = scmp.ne.s32.totalorder %s452, %s453
      %p464 = scmp.eq.s32.totalorder %s35, 0
      %p465 = por %p463, %p464
      %p466 = scmp.ne.s32.totalorder %s452, %s453
      %p467 = scmp.eq.s32.totalorder %s36, 1
      %p468 = por %p466, %p467
      %p470 = scmp.ne.s32.totalorder %s453, %s469
      %p471 = scmp.eq.s32.totalorder %s36, 0
      %p472 = por %p470, %p471
      %p473 = scmp.le.s32.totalorder 1, %s30
      %p474 = scmp.lt.s32.totalorder %s30, 3
      %p475 = pnand %p473, %p474
      %p476 = pneg %p475
      // Predicated region
      $region9: #{tpu_custom_call.1} parent=5 // pred_check
        _
      $region10: #{tpu_custom_call.1} parent=5 // pred_check_branch
        %478 = sbr.rel (%p475) target = $region12
      $region11: #{tpu_custom_call.1} parent=5 // pred_region
        %s479 = ssub.s32 %s30, 1
        // Predicated region
        $region13: #{tpu_custom_call.1} parent=11 // pred_check
          %p480 = pneg %p103
        $region14: #{tpu_custom_call.1} parent=11 // pred_check_branch
          %482 = sbr.rel (%p480) target = $region16
        $region15: #{tpu_custom_call.1} parent=11 // pred_region
          _
        $region16: #{tpu_custom_call.1} parent=11 // pred_fallthru
          _
        // Predicated region
        $region17: #{tpu_custom_call.1} parent=11 // pred_check
          %p483 = pneg %p124
        $region18: #{tpu_custom_call.1} parent=11 // pred_check_branch
          %485 = sbr.rel (%p483) target = $region20
        $region19: #{tpu_custom_call.1} parent=11 // pred_region
          _
        $region20: #{tpu_custom_call.1} parent=11 // pred_fallthru
          _
        // Predicated region
        $region21: #{tpu_custom_call.1} parent=11 // pred_check
          %p486 = pneg %p145
        $region22: #{tpu_custom_call.1} parent=11 // pred_check_branch
          %488 = sbr.rel (%p486) target = $region24
        $region23: #{tpu_custom_call.1} parent=11 // pred_region
          _
        $region24: #{tpu_custom_call.1} parent=11 // pred_fallthru
          _
        // Predicated region
        $region25: #{tpu_custom_call.1} parent=11 // pred_check
          %p489 = pneg %p166
        $region26: #{tpu_custom_call.1} parent=11 // pred_check_branch
          %491 = sbr.rel (%p489) target = $region28
        $region27: #{tpu_custom_call.1} parent=11 // pred_region
          _
        $region28: #{tpu_custom_call.1} parent=11 // pred_fallthru
          _
        // Predicated region
        $region29: #{tpu_custom_call.1} parent=11 // pred_check
          %p492 = pneg %p187
        $region30: #{tpu_custom_call.1} parent=11 // pred_check_branch
          %494 = sbr.rel (%p492) target = $region32
        $region31: #{tpu_custom_call.1} parent=11 // pred_region
          _
        $region32: #{tpu_custom_call.1} parent=11 // pred_fallthru
          _
        // Predicated region
        $region33: #{tpu_custom_call.1} parent=11 // pred_check
          %p495 = pneg %p208
        $region34: #{tpu_custom_call.1} parent=11 // pred_check_branch
          %497 = sbr.rel (%p495) target = $region36
        $region35: #{tpu_custom_call.1} parent=11 // pred_region
          _
        $region36: #{tpu_custom_call.1} parent=11 // pred_fallthru
          _
        // Predicated region
        $region37: #{tpu_custom_call.1} parent=11 // pred_check
          %p498 = pneg %p229
        $region38: #{tpu_custom_call.1} parent=11 // pred_check_branch
          %500 = sbr.rel (%p498) target = $region40
        $region39: #{tpu_custom_call.1} parent=11 // pred_region
          _
        $region40: #{tpu_custom_call.1} parent=11 // pred_fallthru
          _
        // Predicated region
        $region41: #{tpu_custom_call.1} parent=11 // pred_check
          %p501 = pneg %p250
        $region42: #{tpu_custom_call.1} parent=11 // pred_check_branch
          %503 = sbr.rel (%p501) target = $region44
        $region43: #{tpu_custom_call.1} parent=11 // pred_region
          _
        $region44: #{tpu_custom_call.1} parent=11 // pred_fallthru
          _
        // Predicated region
        $region45: #{tpu_custom_call.1} parent=11 // pred_check
          %p504 = pneg %p271
        $region46: #{tpu_custom_call.1} parent=11 // pred_check_branch
          %506 = sbr.rel (%p504) target = $region48
        $region47: #{tpu_custom_call.1} parent=11 // pred_region
          _
        $region48: #{tpu_custom_call.1} parent=11 // pred_fallthru
          _
        // Predicated region
        $region49: #{tpu_custom_call.1} parent=11 // pred_check
          %p507 = pneg %p292
        $region50: #{tpu_custom_call.1} parent=11 // pred_check_branch
          %509 = sbr.rel (%p507) target = $region52
        $region51: #{tpu_custom_call.1} parent=11 // pred_region
          _
        $region52: #{tpu_custom_call.1} parent=11 // pred_fallthru
          _
        // Predicated region
        $region53: #{tpu_custom_call.1} parent=11 // pred_check
          %p510 = pneg %p313
        $region54: #{tpu_custom_call.1} parent=11 // pred_check_branch
          %512 = sbr.rel (%p510) target = $region56
        $region55: #{tpu_custom_call.1} parent=11 // pred_region
          _
        $region56: #{tpu_custom_call.1} parent=11 // pred_fallthru
          _
        // Predicated region
        $region57: #{tpu_custom_call.1} parent=11 // pred_check
          %p513 = pneg %p334
        $region58: #{tpu_custom_call.1} parent=11 // pred_check_branch
          %515 = sbr.rel (%p513) target = $region60
        $region59: #{tpu_custom_call.1} parent=11 // pred_region
          _
        $region60: #{tpu_custom_call.1} parent=11 // pred_fallthru
          _
        // Predicated region
        $region61: #{tpu_custom_call.1} parent=11 // pred_check
          %p516 = pneg %p355
        $region62: #{tpu_custom_call.1} parent=11 // pred_check_branch
          %518 = sbr.rel (%p516) target = $region64
        $region63: #{tpu_custom_call.1} parent=11 // pred_region
          _
        $region64: #{tpu_custom_call.1} parent=11 // pred_fallthru
          _
        // Predicated region
        $region65: #{tpu_custom_call.1} parent=11 // pred_check
          %p519 = pneg %p376
        $region66: #{tpu_custom_call.1} parent=11 // pred_check_branch
          %521 = sbr.rel (%p519) target = $region68
        $region67: #{tpu_custom_call.1} parent=11 // pred_region
          _
        $region68: #{tpu_custom_call.1} parent=11 // pred_fallthru
          _
        // Predicated region
        $region69: #{tpu_custom_call.1} parent=11 // pred_check
          %p522 = pneg %p397
        $region70: #{tpu_custom_call.1} parent=11 // pred_check_branch
          %524 = sbr.rel (%p522) target = $region72
        $region71: #{tpu_custom_call.1} parent=11 // pred_region
          _
        $region72: #{tpu_custom_call.1} parent=11 // pred_fallthru
          _
        // Predicated region
        $region73: #{tpu_custom_call.1} parent=11 // pred_check
          %p525 = pneg %p418
        $region74: #{tpu_custom_call.1} parent=11 // pred_check_branch
          %527 = sbr.rel (%p525) target = $region76
        $region75: #{tpu_custom_call.1} parent=11 // pred_region
          _
        $region76: #{tpu_custom_call.1} parent=11 // pred_fallthru
          _
        // Predicated region
        $region77: #{tpu_custom_call.1} parent=11 // pred_check
          %p528 = pneg %p439
        $region78: #{tpu_custom_call.1} parent=11 // pred_check_branch
          %530 = sbr.rel (%p528) target = $region80
        $region79: #{tpu_custom_call.1} parent=11 // pred_region
          _
        $region80: #{tpu_custom_call.1} parent=11 // pred_fallthru
          _
      $region12: #{tpu_custom_call.1} parent=5 // pred_fallthru
        _
      %p531 = scmp.lt.s32.totalorder %s30, 2
      // Predicated region
      $region81: #{tpu_custom_call.1} parent=5 // pred_check
        %p532 = pneg %p531
      $region82: #{tpu_custom_call.1} parent=5 // pred_check_branch
        %534 = sbr.rel (%p532) target = $region84
      $region83: #{tpu_custom_call.1} parent=5 // pred_region
        // Predicated region
        $region85: #{tpu_custom_call.1} parent=83 // pred_check
          %p535 = pneg %p50
        $region86: #{tpu_custom_call.1} parent=83 // pred_check_branch
          %537 = sbr.rel (%p535) target = $region88
        $region87: #{tpu_custom_call.1} parent=83 // pred_region
          %s538 = smul.u32 16, %s30
          %p539 = scmp.lt.s32.totalorder %s538, 31
          %s540 = scalar_select %p539, %s538, 31
          %s541 = smul.addr %s540, 8
          %s542 = scalar_lea.vmem %s0, %s541
          %s543 = smul.u32 16, %s30
        $region88: #{tpu_custom_call.1} parent=83 // pred_fallthru
          _
        // Predicated region
        $region89: #{tpu_custom_call.1} parent=83 // pred_check
          %p544 = pneg %p76
        $region90: #{tpu_custom_call.1} parent=83 // pred_check_branch
          %546 = sbr.rel (%p544) target = $region92
        $region91: #{tpu_custom_call.1} parent=83 // pred_region
          %s547 = smul.u32 16, %s30
          %p548 = scmp.lt.s32.totalorder %s547, 31
          %s549 = scalar_select %p548, %s547, 31
          %s550 = smul.addr %s549, 8
          %s551 = scalar_lea.vmem %s1, %s550
          %s552 = smul.u32 16, %s30
        $region92: #{tpu_custom_call.1} parent=83 // pred_fallthru
          _
      $region84: #{tpu_custom_call.1} parent=5 // pred_fallthru
        _
      %p553 = scmp.le.s32.totalorder 1, %s30
      %p554 = scmp.lt.s32.totalorder %s30, 3
      %p555 = pnand %p553, %p554
      %p556 = pneg %p555
      // Predicated region
      $region93: #{tpu_custom_call.1} parent=5 // pred_check
        _
      $region94: #{tpu_custom_call.1} parent=5 // pred_check_branch
        %558 = sbr.rel (%p555) target = $region96
      $region95: #{tpu_custom_call.1} parent=5 // pred_region
        %s559 = ssub.s32 %s30, 1
        %s560 = smul.u32 16, %s35
        %p561 = scmp.lt.s32.totalorder %s560, 31
        %s562 = scalar_select %p561, %s560, 31
        %s563 = smul.addr %s562, 8
        %s564 = scalar_lea.vmem %s0, %s563
        %p565 = pneg %p56
        %p566 = pneg %p53
        %s567 = smul.u32 16, %s35
        %p568 = scmp.lt.s32.totalorder %s567, 31
        %s569 = scalar_select %p568, %s567, 31
        %s570 = smul.addr %s569, 8
        %s571 = scalar_lea.vmem %s1, %s570
        %p572 = pneg %p82
        %p573 = pneg %p79
        %p574 = pneg %p103
        %p575 = pneg %p100
        %p576 = pneg %p124
        %p577 = pneg %p121
        %p578 = pneg %p145
        %p579 = pneg %p142
        %p580 = pneg %p166
        %p581 = pneg %p163
        %p582 = pneg %p187
        %p583 = pneg %p184
        %p584 = pneg %p208
        %p585 = pneg %p205
        %p586 = pneg %p229
        %p587 = pneg %p226
        %p588 = pneg %p250
        %p589 = pneg %p247
        %p590 = pneg %p271
        %p591 = pneg %p268
        %p592 = pneg %p292
        %p593 = pneg %p289
        %p594 = pneg %p313
        %p595 = pneg %p310
        %p596 = pneg %p334
        %p597 = pneg %p331
        %p598 = pneg %p355
        %p599 = pneg %p352
        %p600 = pneg %p376
        %p601 = pneg %p373
        %p602 = pneg %p397
        %p603 = pneg %p394
        %p604 = pneg %p418
        %p605 = pneg %p415
        %p606 = pneg %p439
        %p607 = pneg %p436
        %p608 = pneg %p465
        %p609 = pneg %p462
        %s610 = sand.u32 %s452, 1
        %s611 = scalar_lea.sflag [#allocation4], %s610
        %s612 = sand.u32 %s452, 1
        %s613 = smul.addr %s612, 128
        %s614 = scalar_lea.vmem [#allocation3], %s613
        %s615 = smul.u32 16, %s35
        %p616 = scmp.lt.s32.totalorder %s615, 31
        %s617 = scalar_select %p616, %s615, 31
        %s618 = smul.addr %s617, 8
        %s619 = scalar_lea.vmem %s0, %s618
        %s620 = smul.u32 16, %s35
        %s621 = smul.u32 16, %s35
        %p622 = scmp.lt.s32.totalorder %s621, 31
        %s623 = scalar_select %p622, %s621, 31
        %s624 = smul.addr %s623, 8
        %s625 = scalar_lea.vmem %s1, %s624
        %s626 = smul.u32 16, %s35
        %s627 = smul.u32 16, %s35
        %v628 = vld [vmem:[%s619] sm:$0xff]
        %v629 = vld [vmem:[%s619 + $0x8] sm:$0xff]
        %v630 = vld [vmem:[%s619 + $0x10] sm:$0xff]
        %v631 = vld [vmem:[%s619 + $0x18] sm:$0xff]
        %v632 = vld [vmem:[%s619 + $0x20] sm:$0xff]
        %v633 = vld [vmem:[%s619 + $0x28] sm:$0xff]
        %v634 = vld [vmem:[%s619 + $0x30] sm:$0xff]
        %v635 = vld [vmem:[%s619 + $0x38] sm:$0xff]
        %v636 = vld [vmem:[%s619 + $0x40] sm:$0xff]
        %v637 = vld [vmem:[%s619 + $0x48] sm:$0xff]
        %v638 = vld [vmem:[%s619 + $0x50] sm:$0xff]
        %v639 = vld [vmem:[%s619 + $0x58] sm:$0xff]
        %v640 = vld [vmem:[%s619 + $0x60] sm:$0xff]
        %v641 = vld [vmem:[%s619 + $0x68] sm:$0xff]
        %v642 = vld [vmem:[%s619 + $0x70] sm:$0xff]
        %v643 = vld [vmem:[%s619 + $0x78] sm:$0xff]
        %v644 = vld [vmem:[%s2] sm:$0xff]
        %v645 = vld [vmem:[%s2 + $0x8] sm:$0xff]
        %v646 = vld [vmem:[%s3] sm:$0x1]
        %v648 = vlaneseq
        %v649 = vshrl.u32 %v648, 7
        %v650 = vsub.s32 0, %v649
        %v651 = vrot.slane %v646, %v650
        %vm653 = vcmask 130048
        %v655 = vsel %vm653, %v628, 0
        %v658 = vsel %vm653, %v629, 0
        %v661 = vsel %vm653, %v630, 0
        %v664 = vsel %vm653, %v631, 0
        %v667 = vsel %vm653, %v632, 0
        %v670 = vsel %vm653, %v633, 0
        %v673 = vsel %vm653, %v634, 0
        %v676 = vsel %vm653, %v635, 0
        %v679 = vsel %vm653, %v636, 0
        %v682 = vsel %vm653, %v637, 0
        %v685 = vsel %vm653, %v638, 0
        %v688 = vsel %vm653, %v639, 0
        %v691 = vsel %vm653, %v640, 0
        %v694 = vsel %vm653, %v641, 0
        %v697 = vsel %vm653, %v642, 0
        %v700 = vsel %vm653, %v643, 0
        %702 = vmatprep.subr.mxu0 0.0
        %703 = vmatpush1.msra.mxu0 0.0
        %704 = vmatprep.subr.mxu0 0.0
        %705 = vmatpush1.msra.mxu0 0.0
        %706 = vmatprep.subr.mxu0 0.0
        %707 = vmatpush1.msra.mxu0 0.0
        %708 = vmatprep.subr.mxu0 0.0
        %709 = vmatpush1.msra.mxu0 0.0
        %710 = vmatprep.subr.mxu0 0.0
        %711 = vmatpush1.msra.mxu0 0.0
        %712 = vmatprep.subr.mxu0 0.0
        %713 = vmatpush1.msra.mxu0 0.0
        %714 = vmatprep.subr.mxu0 0.0
        %715 = vmatpush1.msra.mxu0 0.0
        %716 = vmatprep.subr.mxu0 0.0
        %717 = vmatpush1.msra.mxu0 0.0
        %718 = vmatprep.subr.mxu0 0.0
        %719 = vmatpush1.msra.mxu0 0.0
        %720 = vmatprep.subr.mxu0 0.0
        %721 = vmatpush1.msra.mxu0 0.0
        %722 = vmatprep.subr.mxu0 0.0
        %723 = vmatpush1.msra.mxu0 0.0
        %724 = vmatprep.subr.mxu0 0.0
        %725 = vmatpush1.msra.mxu0 0.0
        %726 = vmatprep.subr.mxu0 0.0
        %727 = vmatpush1.msra.mxu0 0.0
        %728 = vmatprep.subr.mxu0 0.0
        %729 = vmatpush1.msra.mxu0 0.0
        %730 = vmatprep.subr.mxu0 0.0
        %731 = vmatpush1.msra.mxu0 %v645
        %732 = vmatprep.subr.mxu0 0.0
        %733 = vmatpush1.msra.mxu0 %v644
        %734 = vmatprep.subr.mxu0 0.0
        %735 = vmatpush2.msra.mxu0 0.0
        %736 = vmatprep.subr.mxu0 0.0
        %737 = vmatpush2.msra.mxu0 0.0
        %738 = vmatprep.subr.mxu0 0.0
        %739 = vmatpush2.msra.mxu0 0.0
        %740 = vmatprep.subr.mxu0 0.0
        %741 = vmatpush2.msra.mxu0 0.0
        %742 = vmatprep.subr.mxu0 0.0
        %743 = vmatpush2.msra.mxu0 0.0
        %744 = vmatprep.subr.mxu0 0.0
        %745 = vmatpush2.msra.mxu0 0.0
        %746 = vmatprep.subr.mxu0 0.0
        %747 = vmatpush2.msra.mxu0 0.0
        %748 = vmatprep.subr.mxu0 0.0
        %749 = vmatpush2.msra.mxu0 0.0
        %750 = vmatprep.subr.mxu0 0.0
        %751 = vmatpush2.msra.mxu0 0.0
        %752 = vmatprep.subr.mxu0 0.0
        %753 = vmatpush2.msra.mxu0 0.0
        %754 = vmatprep.subr.mxu0 0.0
        %755 = vmatpush2.msra.mxu0 0.0
        %756 = vmatprep.subr.mxu0 0.0
        %757 = vmatpush2.msra.mxu0 0.0
        %758 = vmatprep.subr.mxu0 0.0
        %759 = vmatpush2.msra.mxu0 0.0
        %760 = vmatprep.subr.mxu0 0.0
        %761 = vmatpush2.msra.mxu0 0.0
        %762 = vmatprep.subr.mxu0 0.0
        %763 = vmatpush2.msra.mxu0 0.0
        %764 = vmatprep.subr.mxu0 0.0
        %765 = vmatpush2.msra.mxu0 0.0
        %766 = vmatprep.mubr.f32.mxu0 0.0
        %767 = vmatmul.mubr.f32.gmra.mxu0 %v655
        %v768 = vpop.f32.mrf.mxu0
        %v769 = vadd.f32 %v651, %v768
        %v770 = vpop.f32.mrf.mxu0
        %771 = vmatprep.mubr.f32.mxu0 0.0
        %772 = vmatmul.mubr.f32.gmra.mxu0 %v658
        %v773 = vpop.f32.mrf.mxu0
        %v774 = vadd.f32 %v651, %v773
        %v775 = vpop.f32.mrf.mxu0
        %776 = vmatprep.mubr.f32.mxu0 0.0
        %777 = vmatmul.mubr.f32.gmra.mxu0 %v661
        %v778 = vpop.f32.mrf.mxu0
        %v779 = vadd.f32 %v651, %v778
        %v780 = vpop.f32.mrf.mxu0
        %781 = vmatprep.mubr.f32.mxu0 0.0
        %782 = vmatmul.mubr.f32.gmra.mxu0 %v664
        %v783 = vpop.f32.mrf.mxu0
        %v784 = vadd.f32 %v651, %v783
        %v785 = vpop.f32.mrf.mxu0
        %786 = vmatprep.mubr.f32.mxu0 0.0
        %787 = vmatmul.mubr.f32.gmra.mxu0 %v667
        %v788 = vpop.f32.mrf.mxu0
        %v789 = vadd.f32 %v651, %v788
        %v790 = vpop.f32.mrf.mxu0
        %791 = vmatprep.mubr.f32.mxu0 0.0
        %792 = vmatmul.mubr.f32.gmra.mxu0 %v670
        %v793 = vpop.f32.mrf.mxu0
        %v794 = vadd.f32 %v651, %v793
        %v795 = vpop.f32.mrf.mxu0
        %796 = vmatprep.mubr.f32.mxu0 0.0
        %797 = vmatmul.mubr.f32.gmra.mxu0 %v673
        %v798 = vpop.f32.mrf.mxu0
        %v799 = vadd.f32 %v651, %v798
        %v800 = vpop.f32.mrf.mxu0
        %801 = vmatprep.mubr.f32.mxu0 0.0
        %802 = vmatmul.mubr.f32.gmra.mxu0 %v676
        %v803 = vpop.f32.mrf.mxu0
        %v804 = vadd.f32 %v651, %v803
        %v805 = vpop.f32.mrf.mxu0
        %806 = vmatprep.mubr.f32.mxu0 0.0
        %807 = vmatmul.mubr.f32.gmra.mxu0 %v679
        %v808 = vpop.f32.mrf.mxu0
        %v809 = vadd.f32 %v651, %v808
        %v810 = vpop.f32.mrf.mxu0
        %811 = vmatprep.mubr.f32.mxu0 0.0
        %812 = vmatmul.mubr.f32.gmra.mxu0 %v682
        %v813 = vpop.f32.mrf.mxu0
        %v814 = vadd.f32 %v651, %v813
        %v815 = vpop.f32.mrf.mxu0
        %816 = vmatprep.mubr.f32.mxu0 0.0
        %817 = vmatmul.mubr.f32.gmra.mxu0 %v685
        %v818 = vpop.f32.mrf.mxu0
        %v819 = vadd.f32 %v651, %v818
        %v820 = vpop.f32.mrf.mxu0
        %821 = vmatprep.mubr.f32.mxu0 0.0
        %822 = vmatmul.mubr.f32.gmra.mxu0 %v688
        %v823 = vpop.f32.mrf.mxu0
        %v824 = vadd.f32 %v651, %v823
        %v825 = vpop.f32.mrf.mxu0
        %826 = vmatprep.mubr.f32.mxu0 0.0
        %827 = vmatmul.mubr.f32.gmra.mxu0 %v691
        %v828 = vpop.f32.mrf.mxu0
        %v829 = vadd.f32 %v651, %v828
        %v830 = vpop.f32.mrf.mxu0
        %831 = vmatprep.mubr.f32.mxu0 0.0
        %832 = vmatmul.mubr.f32.gmra.mxu0 %v694
        %v833 = vpop.f32.mrf.mxu0
        %v834 = vadd.f32 %v651, %v833
        %v835 = vpop.f32.mrf.mxu0
        %836 = vmatprep.mubr.f32.mxu0 0.0
        %837 = vmatmul.mubr.f32.gmra.mxu0 %v697
        %v838 = vpop.f32.mrf.mxu0
        %v839 = vadd.f32 %v651, %v838
        %v840 = vpop.f32.mrf.mxu0
        %841 = vmatprep.mubr.f32.mxu0 0.0
        %842 = vmatmul.mubr.f32.gmra.mxu0 %v700
        %v843 = vpop.f32.mrf.mxu0
        %v844 = vadd.f32 %v651, %v843
        %v845 = vpop.f32.mrf.mxu0
        %846 = vdwg.mxu0
        %v847 = vmax.f32 %v769, 0.0
        %v848 = vmax.f32 %v774, 0.0
        %v849 = vmax.f32 %v779, 0.0
        %v850 = vmax.f32 %v784, 0.0
        %v851 = vmax.f32 %v789, 0.0
        %v852 = vmax.f32 %v794, 0.0
        %v853 = vmax.f32 %v799, 0.0
        %v854 = vmax.f32 %v804, 0.0
        %v855 = vmax.f32 %v809, 0.0
        %v856 = vmax.f32 %v814, 0.0
        %v857 = vmax.f32 %v819, 0.0
        %v858 = vmax.f32 %v824, 0.0
        %v859 = vmax.f32 %v829, 0.0
        %v860 = vmax.f32 %v834, 0.0
        %v861 = vmax.f32 %v839, 0.0
        %v862 = vmax.f32 %v844, 0.0
        %v863 = vld [vmem:[%s4] sm:$0xff]
        %v864 = vld [vmem:[%s4 + $0x8] sm:$0xff]
        %v865 = vld [vmem:[%s4 + $0x10] sm:$0xff]
        %v866 = vld [vmem:[%s4 + $0x18] sm:$0xff]
        %v867 = vld [vmem:[%s5] sm:$0x1]
        %v869 = vlaneseq
        %v870 = vshrl.u32 %v869, 7
        %v871 = vsub.s32 0, %v870
        %v872 = vrot.slane %v867, %v871
        %vm874 = vcmask 261120
        %v876 = vsel %vm874, %v847, 0
        %v879 = vsel %vm874, %v848, 0
        %v882 = vsel %vm874, %v849, 0
        %v885 = vsel %vm874, %v850, 0
        %v888 = vsel %vm874, %v851, 0
        %v891 = vsel %vm874, %v852, 0
        %v894 = vsel %vm874, %v853, 0
        %v897 = vsel %vm874, %v854, 0
        %v900 = vsel %vm874, %v855, 0
        %v903 = vsel %vm874, %v856, 0
        %v906 = vsel %vm874, %v857, 0
        %v909 = vsel %vm874, %v858, 0
        %v912 = vsel %vm874, %v859, 0
        %v915 = vsel %vm874, %v860, 0
        %v918 = vsel %vm874, %v861, 0
        %v921 = vsel %vm874, %v862, 0
        %923 = vmatprep.subr.mxu0 0.0
        %924 = vmatpush1.msra.mxu0 0.0
        %925 = vmatprep.subr.mxu0 0.0
        %926 = vmatpush1.msra.mxu0 0.0
        %927 = vmatprep.subr.mxu0 0.0
        %928 = vmatpush1.msra.mxu0 0.0
        %929 = vmatprep.subr.mxu0 0.0
        %930 = vmatpush1.msra.mxu0 0.0
        %931 = vmatprep.subr.mxu0 0.0
        %932 = vmatpush1.msra.mxu0 0.0
        %933 = vmatprep.subr.mxu0 0.0
        %934 = vmatpush1.msra.mxu0 0.0
        %935 = vmatprep.subr.mxu0 0.0
        %936 = vmatpush1.msra.mxu0 0.0
        %937 = vmatprep.subr.mxu0 0.0
        %938 = vmatpush1.msra.mxu0 0.0
        %939 = vmatprep.subr.mxu0 0.0
        %940 = vmatpush1.msra.mxu0 0.0
        %941 = vmatprep.subr.mxu0 0.0
        %942 = vmatpush1.msra.mxu0 0.0
        %943 = vmatprep.subr.mxu0 0.0
        %944 = vmatpush1.msra.mxu0 0.0
        %945 = vmatprep.subr.mxu0 0.0
        %946 = vmatpush1.msra.mxu0 0.0
        %947 = vmatprep.subr.mxu0 0.0
        %948 = vmatpush1.msra.mxu0 %v866
        %949 = vmatprep.subr.mxu0 0.0
        %950 = vmatpush1.msra.mxu0 %v865
        %951 = vmatprep.subr.mxu0 0.0
        %952 = vmatpush1.msra.mxu0 %v864
        %953 = vmatprep.subr.mxu0 0.0
        %954 = vmatpush1.msra.mxu0 %v863
        %955 = vmatprep.subr.mxu0 0.0
        %956 = vmatpush2.msra.mxu0 0.0
        %957 = vmatprep.subr.mxu0 0.0
        %958 = vmatpush2.msra.mxu0 0.0
        %959 = vmatprep.subr.mxu0 0.0
        %960 = vmatpush2.msra.mxu0 0.0
        %961 = vmatprep.subr.mxu0 0.0
        %962 = vmatpush2.msra.mxu0 0.0
        %963 = vmatprep.subr.mxu0 0.0
        %964 = vmatpush2.msra.mxu0 0.0
        %965 = vmatprep.subr.mxu0 0.0
        %966 = vmatpush2.msra.mxu0 0.0
        %967 = vmatprep.subr.mxu0 0.0
        %968 = vmatpush2.msra.mxu0 0.0
        %969 = vmatprep.subr.mxu0 0.0
        %970 = vmatpush2.msra.mxu0 0.0
        %971 = vmatprep.subr.mxu0 0.0
        %972 = vmatpush2.msra.mxu0 0.0
        %973 = vmatprep.subr.mxu0 0.0
        %974 = vmatpush2.msra.mxu0 0.0
        %975 = vmatprep.subr.mxu0 0.0
        %976 = vmatpush2.msra.mxu0 0.0
        %977 = vmatprep.subr.mxu0 0.0
        %978 = vmatpush2.msra.mxu0 0.0
        %979 = vmatprep.subr.mxu0 0.0
        %980 = vmatpush2.msra.mxu0 0.0
        %981 = vmatprep.subr.mxu0 0.0
        %982 = vmatpush2.msra.mxu0 0.0
        %983 = vmatprep.subr.mxu0 0.0
        %984 = vmatpush2.msra.mxu0 0.0
        %985 = vmatprep.subr.mxu0 0.0
        %986 = vmatpush2.msra.mxu0 0.0
        %987 = vmatprep.mubr.f32.mxu0 0.0
        %988 = vmatmul.mubr.f32.gmra.mxu0 %v876
        %v989 = vpop.f32.mrf.mxu0
        %v990 = vadd.f32 %v872, %v989
        %v991 = vpop.f32.mrf.mxu0
        %992 = vmatprep.mubr.f32.mxu0 0.0
        %993 = vmatmul.mubr.f32.gmra.mxu0 %v879
        %v994 = vpop.f32.mrf.mxu0
        %v995 = vadd.f32 %v872, %v994
        %v996 = vpop.f32.mrf.mxu0
        %997 = vmatprep.mubr.f32.mxu0 0.0
        %998 = vmatmul.mubr.f32.gmra.mxu0 %v882
        %v999 = vpop.f32.mrf.mxu0
        %v1000 = vadd.f32 %v872, %v999
        %v1001 = vpop.f32.mrf.mxu0
        %1002 = vmatprep.mubr.f32.mxu0 0.0
        %1003 = vmatmul.mubr.f32.gmra.mxu0 %v885
        %v1004 = vpop.f32.mrf.mxu0
        %v1005 = vadd.f32 %v872, %v1004
        %v1006 = vpop.f32.mrf.mxu0
        %1007 = vmatprep.mubr.f32.mxu0 0.0
        %1008 = vmatmul.mubr.f32.gmra.mxu0 %v888
        %v1009 = vpop.f32.mrf.mxu0
        %v1010 = vadd.f32 %v872, %v1009
        %v1011 = vpop.f32.mrf.mxu0
        %1012 = vmatprep.mubr.f32.mxu0 0.0
        %1013 = vmatmul.mubr.f32.gmra.mxu0 %v891
        %v1014 = vpop.f32.mrf.mxu0
        %v1015 = vadd.f32 %v872, %v1014
        %v1016 = vpop.f32.mrf.mxu0
        %1017 = vmatprep.mubr.f32.mxu0 0.0
        %1018 = vmatmul.mubr.f32.gmra.mxu0 %v894
        %v1019 = vpop.f32.mrf.mxu0
        %v1020 = vadd.f32 %v872, %v1019
        %v1021 = vpop.f32.mrf.mxu0
        %1022 = vmatprep.mubr.f32.mxu0 0.0
        %1023 = vmatmul.mubr.f32.gmra.mxu0 %v897
        %v1024 = vpop.f32.mrf.mxu0
        %v1025 = vadd.f32 %v872, %v1024
        %v1026 = vpop.f32.mrf.mxu0
        %1027 = vmatprep.mubr.f32.mxu0 0.0
        %1028 = vmatmul.mubr.f32.gmra.mxu0 %v900
        %v1029 = vpop.f32.mrf.mxu0
        %v1030 = vadd.f32 %v872, %v1029
        %v1031 = vpop.f32.mrf.mxu0
        %1032 = vmatprep.mubr.f32.mxu0 0.0
        %1033 = vmatmul.mubr.f32.gmra.mxu0 %v903
        %v1034 = vpop.f32.mrf.mxu0
        %v1035 = vadd.f32 %v872, %v1034
        %v1036 = vpop.f32.mrf.mxu0
        %1037 = vmatprep.mubr.f32.mxu0 0.0
        %1038 = vmatmul.mubr.f32.gmra.mxu0 %v906
        %v1039 = vpop.f32.mrf.mxu0
        %v1040 = vadd.f32 %v872, %v1039
        %v1041 = vpop.f32.mrf.mxu0
        %1042 = vmatprep.mubr.f32.mxu0 0.0
        %1043 = vmatmul.mubr.f32.gmra.mxu0 %v909
        %v1044 = vpop.f32.mrf.mxu0
        %v1045 = vadd.f32 %v872, %v1044
        %v1046 = vpop.f32.mrf.mxu0
        %1047 = vmatprep.mubr.f32.mxu0 0.0
        %1048 = vmatmul.mubr.f32.gmra.mxu0 %v912
        %v1049 = vpop.f32.mrf.mxu0
        %v1050 = vadd.f32 %v872, %v1049
        %v1051 = vpop.f32.mrf.mxu0
        %1052 = vmatprep.mubr.f32.mxu0 0.0
        %1053 = vmatmul.mubr.f32.gmra.mxu0 %v915
        %v1054 = vpop.f32.mrf.mxu0
        %v1055 = vadd.f32 %v872, %v1054
        %v1056 = vpop.f32.mrf.mxu0
        %1057 = vmatprep.mubr.f32.mxu0 0.0
        %1058 = vmatmul.mubr.f32.gmra.mxu0 %v918
        %v1059 = vpop.f32.mrf.mxu0
        %v1060 = vadd.f32 %v872, %v1059
        %v1061 = vpop.f32.mrf.mxu0
        %1062 = vmatprep.mubr.f32.mxu0 0.0
        %1063 = vmatmul.mubr.f32.gmra.mxu0 %v921
        %v1064 = vpop.f32.mrf.mxu0
        %v1065 = vadd.f32 %v872, %v1064
        %v1066 = vpop.f32.mrf.mxu0
        %1067 = vdwg.mxu0
        %v1068 = vmax.f32 %v990, 0.0
        %v1069 = vmax.f32 %v995, 0.0
        %v1070 = vmax.f32 %v1000, 0.0
        %v1071 = vmax.f32 %v1005, 0.0
        %v1072 = vmax.f32 %v1010, 0.0
        %v1073 = vmax.f32 %v1015, 0.0
        %v1074 = vmax.f32 %v1020, 0.0
        %v1075 = vmax.f32 %v1025, 0.0
        %v1076 = vmax.f32 %v1030, 0.0
        %v1077 = vmax.f32 %v1035, 0.0
        %v1078 = vmax.f32 %v1040, 0.0
        %v1079 = vmax.f32 %v1045, 0.0
        %v1080 = vmax.f32 %v1050, 0.0
        %v1081 = vmax.f32 %v1055, 0.0
        %v1082 = vmax.f32 %v1060, 0.0
        %v1083 = vmax.f32 %v1065, 0.0
        %v1084 = vld [vmem:[%s6] sm:$0xff]
        %v1085 = vld [vmem:[%s6 + $0x8] sm:$0xff]
        %v1086 = vld [vmem:[%s6 + $0x10] sm:$0xff]
        %v1087 = vld [vmem:[%s6 + $0x18] sm:$0xff]
        %v1088 = vld [vmem:[%s7] sm:$0x1]
        %v1090 = vlaneseq
        %v1091 = vshrl.u32 %v1090, 7
        %v1092 = vsub.s32 0, %v1091
        %v1093 = vrot.slane %v1088, %v1092
        %v1096 = vsel %vm874, %v1068, 0
        %v1099 = vsel %vm874, %v1069, 0
        %v1102 = vsel %vm874, %v1070, 0
        %v1105 = vsel %vm874, %v1071, 0
        %v1108 = vsel %vm874, %v1072, 0
        %v1111 = vsel %vm874, %v1073, 0
        %v1114 = vsel %vm874, %v1074, 0
        %v1117 = vsel %vm874, %v1075, 0
        %v1120 = vsel %vm874, %v1076, 0
        %v1123 = vsel %vm874, %v1077, 0
        %v1126 = vsel %vm874, %v1078, 0
        %v1129 = vsel %vm874, %v1079, 0
        %v1132 = vsel %vm874, %v1080, 0
        %v1135 = vsel %vm874, %v1081, 0
        %v1138 = vsel %vm874, %v1082, 0
        %v1141 = vsel %vm874, %v1083, 0
        %1143 = vmatprep.subr.mxu0 0.0
        %1144 = vmatpush1.msra.mxu0 0.0
        %1145 = vmatprep.subr.mxu0 0.0
        %1146 = vmatpush1.msra.mxu0 0.0
        %1147 = vmatprep.subr.mxu0 0.0
        %1148 = vmatpush1.msra.mxu0 0.0
        %1149 = vmatprep.subr.mxu0 0.0
        %1150 = vmatpush1.msra.mxu0 0.0
        %1151 = vmatprep.subr.mxu0 0.0
        %1152 = vmatpush1.msra.mxu0 0.0
        %1153 = vmatprep.subr.mxu0 0.0
        %1154 = vmatpush1.msra.mxu0 0.0
        %1155 = vmatprep.subr.mxu0 0.0
        %1156 = vmatpush1.msra.mxu0 0.0
        %1157 = vmatprep.subr.mxu0 0.0
        %1158 = vmatpush1.msra.mxu0 0.0
        %1159 = vmatprep.subr.mxu0 0.0
        %1160 = vmatpush1.msra.mxu0 0.0
        %1161 = vmatprep.subr.mxu0 0.0
        %1162 = vmatpush1.msra.mxu0 0.0
        %1163 = vmatprep.subr.mxu0 0.0
        %1164 = vmatpush1.msra.mxu0 0.0
        %1165 = vmatprep.subr.mxu0 0.0
        %1166 = vmatpush1.msra.mxu0 0.0
        %1167 = vmatprep.subr.mxu0 0.0
        %1168 = vmatpush1.msra.mxu0 %v1087
        %1169 = vmatprep.subr.mxu0 0.0
        %1170 = vmatpush1.msra.mxu0 %v1086
        %1171 = vmatprep.subr.mxu0 0.0
        %1172 = vmatpush1.msra.mxu0 %v1085
        %1173 = vmatprep.subr.mxu0 0.0
        %1174 = vmatpush1.msra.mxu0 %v1084
        %1175 = vmatprep.subr.mxu0 0.0
        %1176 = vmatpush2.msra.mxu0 0.0
        %1177 = vmatprep.subr.mxu0 0.0
        %1178 = vmatpush2.msra.mxu0 0.0
        %1179 = vmatprep.subr.mxu0 0.0
        %1180 = vmatpush2.msra.mxu0 0.0
        %1181 = vmatprep.subr.mxu0 0.0
        %1182 = vmatpush2.msra.mxu0 0.0
        %1183 = vmatprep.subr.mxu0 0.0
        %1184 = vmatpush2.msra.mxu0 0.0
        %1185 = vmatprep.subr.mxu0 0.0
        %1186 = vmatpush2.msra.mxu0 0.0
        %1187 = vmatprep.subr.mxu0 0.0
        %1188 = vmatpush2.msra.mxu0 0.0
        %1189 = vmatprep.subr.mxu0 0.0
        %1190 = vmatpush2.msra.mxu0 0.0
        %1191 = vmatprep.subr.mxu0 0.0
        %1192 = vmatpush2.msra.mxu0 0.0
        %1193 = vmatprep.subr.mxu0 0.0
        %1194 = vmatpush2.msra.mxu0 0.0
        %1195 = vmatprep.subr.mxu0 0.0
        %1196 = vmatpush2.msra.mxu0 0.0
        %1197 = vmatprep.subr.mxu0 0.0
        %1198 = vmatpush2.msra.mxu0 0.0
        %1199 = vmatprep.subr.mxu0 0.0
        %1200 = vmatpush2.msra.mxu0 0.0
        %1201 = vmatprep.subr.mxu0 0.0
        %1202 = vmatpush2.msra.mxu0 0.0
        %1203 = vmatprep.subr.mxu0 0.0
        %1204 = vmatpush2.msra.mxu0 0.0
        %1205 = vmatprep.subr.mxu0 0.0
        %1206 = vmatpush2.msra.mxu0 0.0
        %1207 = vmatprep.mubr.f32.mxu0 0.0
        %1208 = vmatmul.mubr.f32.gmra.mxu0 %v1096
        %v1209 = vpop.f32.mrf.mxu0
        %v1210 = vadd.f32 %v1093, %v1209
        %v1211 = vpop.f32.mrf.mxu0
        %1212 = vmatprep.mubr.f32.mxu0 0.0
        %1213 = vmatmul.mubr.f32.gmra.mxu0 %v1099
        %v1214 = vpop.f32.mrf.mxu0
        %v1215 = vadd.f32 %v1093, %v1214
        %v1216 = vpop.f32.mrf.mxu0
        %1217 = vmatprep.mubr.f32.mxu0 0.0
        %1218 = vmatmul.mubr.f32.gmra.mxu0 %v1102
        %v1219 = vpop.f32.mrf.mxu0
        %v1220 = vadd.f32 %v1093, %v1219
        %v1221 = vpop.f32.mrf.mxu0
        %1222 = vmatprep.mubr.f32.mxu0 0.0
        %1223 = vmatmul.mubr.f32.gmra.mxu0 %v1105
        %v1224 = vpop.f32.mrf.mxu0
        %v1225 = vadd.f32 %v1093, %v1224
        %v1226 = vpop.f32.mrf.mxu0
        %1227 = vmatprep.mubr.f32.mxu0 0.0
        %1228 = vmatmul.mubr.f32.gmra.mxu0 %v1108
        %v1229 = vpop.f32.mrf.mxu0
        %v1230 = vadd.f32 %v1093, %v1229
        %v1231 = vpop.f32.mrf.mxu0
        %1232 = vmatprep.mubr.f32.mxu0 0.0
        %1233 = vmatmul.mubr.f32.gmra.mxu0 %v1111
        %v1234 = vpop.f32.mrf.mxu0
        %v1235 = vadd.f32 %v1093, %v1234
        %v1236 = vpop.f32.mrf.mxu0
        %1237 = vmatprep.mubr.f32.mxu0 0.0
        %1238 = vmatmul.mubr.f32.gmra.mxu0 %v1114
        %v1239 = vpop.f32.mrf.mxu0
        %v1240 = vadd.f32 %v1093, %v1239
        %v1241 = vpop.f32.mrf.mxu0
        %1242 = vmatprep.mubr.f32.mxu0 0.0
        %1243 = vmatmul.mubr.f32.gmra.mxu0 %v1117
        %v1244 = vpop.f32.mrf.mxu0
        %v1245 = vadd.f32 %v1093, %v1244
        %v1246 = vpop.f32.mrf.mxu0
        %1247 = vmatprep.mubr.f32.mxu0 0.0
        %1248 = vmatmul.mubr.f32.gmra.mxu0 %v1120
        %v1249 = vpop.f32.mrf.mxu0
        %v1250 = vadd.f32 %v1093, %v1249
        %v1251 = vpop.f32.mrf.mxu0
        %1252 = vmatprep.mubr.f32.mxu0 0.0
        %1253 = vmatmul.mubr.f32.gmra.mxu0 %v1123
        %v1254 = vpop.f32.mrf.mxu0
        %v1255 = vadd.f32 %v1093, %v1254
        %v1256 = vpop.f32.mrf.mxu0
        %1257 = vmatprep.mubr.f32.mxu0 0.0
        %1258 = vmatmul.mubr.f32.gmra.mxu0 %v1126
        %v1259 = vpop.f32.mrf.mxu0
        %v1260 = vadd.f32 %v1093, %v1259
        %v1261 = vpop.f32.mrf.mxu0
        %1262 = vmatprep.mubr.f32.mxu0 0.0
        %1263 = vmatmul.mubr.f32.gmra.mxu0 %v1129
        %v1264 = vpop.f32.mrf.mxu0
        %v1265 = vadd.f32 %v1093, %v1264
        %v1266 = vpop.f32.mrf.mxu0
        %1267 = vmatprep.mubr.f32.mxu0 0.0
        %1268 = vmatmul.mubr.f32.gmra.mxu0 %v1132
        %v1269 = vpop.f32.mrf.mxu0
        %v1270 = vadd.f32 %v1093, %v1269
        %v1271 = vpop.f32.mrf.mxu0
        %1272 = vmatprep.mubr.f32.mxu0 0.0
        %1273 = vmatmul.mubr.f32.gmra.mxu0 %v1135
        %v1274 = vpop.f32.mrf.mxu0
        %v1275 = vadd.f32 %v1093, %v1274
        %v1276 = vpop.f32.mrf.mxu0
        %1277 = vmatprep.mubr.f32.mxu0 0.0
        %1278 = vmatmul.mubr.f32.gmra.mxu0 %v1138
        %v1279 = vpop.f32.mrf.mxu0
        %v1280 = vadd.f32 %v1093, %v1279
        %v1281 = vpop.f32.mrf.mxu0
        %1282 = vmatprep.mubr.f32.mxu0 0.0
        %1283 = vmatmul.mubr.f32.gmra.mxu0 %v1141
        %v1284 = vpop.f32.mrf.mxu0
        %v1285 = vadd.f32 %v1093, %v1284
        %v1286 = vpop.f32.mrf.mxu0
        %1287 = vdwg.mxu0
        %vm1288 = vcmp.gt.f32.partialorder %v1210, 0.0
        %vm1289 = vcmp.gt.f32.partialorder %v1215, 0.0
        %vm1290 = vcmp.gt.f32.partialorder %v1220, 0.0
        %vm1291 = vcmp.gt.f32.partialorder %v1225, 0.0
        %vm1292 = vcmp.gt.f32.partialorder %v1230, 0.0
        %vm1293 = vcmp.gt.f32.partialorder %v1235, 0.0
        %vm1294 = vcmp.gt.f32.partialorder %v1240, 0.0
        %vm1295 = vcmp.gt.f32.partialorder %v1245, 0.0
        %vm1296 = vcmp.gt.f32.partialorder %v1250, 0.0
        %vm1297 = vcmp.gt.f32.partialorder %v1255, 0.0
        %vm1298 = vcmp.gt.f32.partialorder %v1260, 0.0
        %vm1299 = vcmp.gt.f32.partialorder %v1265, 0.0
        %vm1300 = vcmp.gt.f32.partialorder %v1270, 0.0
        %vm1301 = vcmp.gt.f32.partialorder %v1275, 0.0
        %vm1302 = vcmp.gt.f32.partialorder %v1280, 0.0
        %vm1303 = vcmp.gt.f32.partialorder %v1285, 0.0
        %v1304 = vmul.f32 %v1210, %v1210
        %v1305 = vmul.f32 %v1215, %v1215
        %v1306 = vmul.f32 %v1220, %v1220
        %v1307 = vmul.f32 %v1225, %v1225
        %v1308 = vmul.f32 %v1230, %v1230
        %v1309 = vmul.f32 %v1235, %v1235
        %v1310 = vmul.f32 %v1240, %v1240
        %v1311 = vmul.f32 %v1245, %v1245
        %v1312 = vmul.f32 %v1250, %v1250
        %v1313 = vmul.f32 %v1255, %v1255
        %v1314 = vmul.f32 %v1260, %v1260
        %v1315 = vmul.f32 %v1265, %v1265
        %v1316 = vmul.f32 %v1270, %v1270
        %v1317 = vmul.f32 %v1275, %v1275
        %v1318 = vmul.f32 %v1280, %v1280
        %v1319 = vmul.f32 %v1285, %v1285
        %v1320 = vadd.f32 %v1304, 1.0
        %v1321 = vadd.f32 %v1305, 1.0
        %v1322 = vadd.f32 %v1306, 1.0
        %v1323 = vadd.f32 %v1307, 1.0
        %v1324 = vadd.f32 %v1308, 1.0
        %v1325 = vadd.f32 %v1309, 1.0
        %v1326 = vadd.f32 %v1310, 1.0
        %v1327 = vadd.f32 %v1311, 1.0
        %v1328 = vadd.f32 %v1312, 1.0
        %v1329 = vadd.f32 %v1313, 1.0
        %v1330 = vadd.f32 %v1314, 1.0
        %v1331 = vadd.f32 %v1315, 1.0
        %v1332 = vadd.f32 %v1316, 1.0
        %v1333 = vadd.f32 %v1317, 1.0
        %v1334 = vadd.f32 %v1318, 1.0
        %v1335 = vadd.f32 %v1319, 1.0
        %v1336 = vrsqrt.pop %v1320
        %v1337 = vrsqrt.pop %v1321
        %v1338 = vrsqrt.pop %v1322
        %v1339 = vrsqrt.pop %v1323
        %v1340 = vrsqrt.pop %v1324
        %v1341 = vrsqrt.pop %v1325
        %v1342 = vrsqrt.pop %v1326
        %v1343 = vrsqrt.pop %v1327
        %v1344 = vrsqrt.pop %v1328
        %v1345 = vrsqrt.pop %v1329
        %v1346 = vrsqrt.pop %v1330
        %v1347 = vrsqrt.pop %v1331
        %v1348 = vrsqrt.pop %v1332
        %v1349 = vrsqrt.pop %v1333
        %v1350 = vrsqrt.pop %v1334
        %v1351 = vrsqrt.pop %v1335
        %v1352 = vmul.f32 %v1210, %v1336
        %v1353 = vmul.f32 %v1215, %v1337
        %v1354 = vmul.f32 %v1220, %v1338
        %v1355 = vmul.f32 %v1225, %v1339
        %v1356 = vmul.f32 %v1230, %v1340
        %v1357 = vmul.f32 %v1235, %v1341
        %v1358 = vmul.f32 %v1240, %v1342
        %v1359 = vmul.f32 %v1245, %v1343
        %v1360 = vmul.f32 %v1250, %v1344
        %v1361 = vmul.f32 %v1255, %v1345
        %v1362 = vmul.f32 %v1260, %v1346
        %v1363 = vmul.f32 %v1265, %v1347
        %v1364 = vmul.f32 %v1270, %v1348
        %v1365 = vmul.f32 %v1275, %v1349
        %v1366 = vmul.f32 %v1280, %v1350
        %v1367 = vmul.f32 %v1285, %v1351
        %v1368 = vsel %vm1288, %v1210, %v1352
        %v1369 = vsel %vm1289, %v1215, %v1353
        %v1370 = vsel %vm1290, %v1220, %v1354
        %v1371 = vsel %vm1291, %v1225, %v1355
        %v1372 = vsel %vm1292, %v1230, %v1356
        %v1373 = vsel %vm1293, %v1235, %v1357
        %v1374 = vsel %vm1294, %v1240, %v1358
        %v1375 = vsel %vm1295, %v1245, %v1359
        %v1376 = vsel %vm1296, %v1250, %v1360
        %v1377 = vsel %vm1297, %v1255, %v1361
        %v1378 = vsel %vm1298, %v1260, %v1362
        %v1379 = vsel %vm1299, %v1265, %v1363
        %v1380 = vsel %vm1300, %v1270, %v1364
        %v1381 = vsel %vm1301, %v1275, %v1365
        %v1382 = vsel %vm1302, %v1280, %v1366
        %v1383 = vsel %vm1303, %v1285, %v1367
        %v1384 = vadd.f32 %v1368, 1.005
        %v1385 = vadd.f32 %v1369, 1.005
        %v1386 = vadd.f32 %v1370, 1.005
        %v1387 = vadd.f32 %v1371, 1.005
        %v1388 = vadd.f32 %v1372, 1.005
        %v1389 = vadd.f32 %v1373, 1.005
        %v1390 = vadd.f32 %v1374, 1.005
        %v1391 = vadd.f32 %v1375, 1.005
        %v1392 = vadd.f32 %v1376, 1.005
        %v1393 = vadd.f32 %v1377, 1.005
        %v1394 = vadd.f32 %v1378, 1.005
        %v1395 = vadd.f32 %v1379, 1.005
        %v1396 = vadd.f32 %v1380, 1.005
        %v1397 = vadd.f32 %v1381, 1.005
        %v1398 = vadd.f32 %v1382, 1.005
        %v1399 = vadd.f32 %v1383, 1.005
        %v1400 = vld [vmem:[#allocation2] sm:$0x1]
        %v1401 = vld [vmem:[%s9] sm:$0x1]
        %v1403 = vlaneseq
        %v1404 = vshrl.u32 %v1403, 7
        %v1405 = vsub.s32 0, %v1404
        %v1406 = vrot.slane %v1400, %v1405
        %1407 = vset.pattern.permute.xlu0 0
        %1408 = vperm.xlu0 %1407, %v1406
        %v1409 = vpop.permute.xlu0 %1408
        %v1412 = vlaneseq
        %v1413 = vshrl.u32 %v1412, 7
        %v1414 = vsub.s32 0, %v1413
        %v1415 = vrot.slane %v1401, %v1414
        %v1417 = vmul.f32 %v1409, %v1415
        %v1418 = vld [vmem:[%s10] sm:$0x1]
        %v1420 = vlaneseq
        %v1421 = vshrl.u32 %v1420, 7
        %v1422 = vsub.s32 0, %v1421
        %v1423 = vrot.slane %v1418, %v1422
        %v1425 = vadd.f32 %v1417, %v1423
        %v1426 = vld [vmem:[%s11] sm:$0x1]
        %v1428 = vlaneseq
        %v1429 = vshrl.u32 %v1428, 7
        %v1430 = vsub.s32 0, %v1429
        %v1431 = vrot.slane %v1426, %v1430
        %v1433 = vmul.f32 %v1409, %v1431
        %v1434 = vld [vmem:[%s12] sm:$0x1]
        %v1436 = vlaneseq
        %v1437 = vshrl.u32 %v1436, 7
        %v1438 = vsub.s32 0, %v1437
        %v1439 = vrot.slane %v1434, %v1438
        %v1441 = vadd.f32 %v1433, %v1439
        %vm1442 = vcmp.gt.f32.partialorder %v1441, 0.0
        %v1443 = vmul.f32 %v1441, %v1441
        %v1444 = vadd.f32 %v1443, 1.0
        %v1445 = vrsqrt.pop %v1444
        %v1446 = vmul.f32 %v1441, %v1445
        %v1447 = vsel %vm1442, %v1441, %v1446
        %v1448 = vadd.f32 %v1447, 1.005
        %v1449 = vld [vmem:[%s625] sm:$0xff]
        %v1450 = vld [vmem:[%s625 + $0x8] sm:$0xff]
        %v1451 = vld [vmem:[%s625 + $0x10] sm:$0xff]
        %v1452 = vld [vmem:[%s625 + $0x18] sm:$0xff]
        %v1453 = vld [vmem:[%s625 + $0x20] sm:$0xff]
        %v1454 = vld [vmem:[%s625 + $0x28] sm:$0xff]
        %v1455 = vld [vmem:[%s625 + $0x30] sm:$0xff]
        %v1456 = vld [vmem:[%s625 + $0x38] sm:$0xff]
        %v1457 = vld [vmem:[%s625 + $0x40] sm:$0xff]
        %v1458 = vld [vmem:[%s625 + $0x48] sm:$0xff]
        %v1459 = vld [vmem:[%s625 + $0x50] sm:$0xff]
        %v1460 = vld [vmem:[%s625 + $0x58] sm:$0xff]
        %v1461 = vld [vmem:[%s625 + $0x60] sm:$0xff]
        %v1462 = vld [vmem:[%s625 + $0x68] sm:$0xff]
        %v1463 = vld [vmem:[%s625 + $0x70] sm:$0xff]
        %v1464 = vld [vmem:[%s625 + $0x78] sm:$0xff]
        %1481 = vrot.lane.b32.xlu0 %v1384, 120
        %v1482 = vpop.permute.xlu0 %1481
        %1483 = vrot.lane.b32.xlu0 %v1385, 120
        %v1484 = vpop.permute.xlu0 %1483
        %1485 = vrot.lane.b32.xlu0 %v1386, 120
        %v1486 = vpop.permute.xlu0 %1485
        %1487 = vrot.lane.b32.xlu0 %v1387, 120
        %v1488 = vpop.permute.xlu0 %1487
        %1489 = vrot.lane.b32.xlu0 %v1388, 120
        %v1490 = vpop.permute.xlu0 %1489
        %1491 = vrot.lane.b32.xlu0 %v1389, 120
        %v1492 = vpop.permute.xlu0 %1491
        %1493 = vrot.lane.b32.xlu0 %v1390, 120
        %v1494 = vpop.permute.xlu0 %1493
        %1495 = vrot.lane.b32.xlu0 %v1391, 120
        %v1496 = vpop.permute.xlu0 %1495
        %1497 = vrot.lane.b32.xlu0 %v1392, 120
        %v1498 = vpop.permute.xlu0 %1497
        %1499 = vrot.lane.b32.xlu0 %v1393, 120
        %v1500 = vpop.permute.xlu0 %1499
        %1501 = vrot.lane.b32.xlu0 %v1394, 120
        %v1502 = vpop.permute.xlu0 %1501
        %1503 = vrot.lane.b32.xlu0 %v1395, 120
        %v1504 = vpop.permute.xlu0 %1503
        %1505 = vrot.lane.b32.xlu0 %v1396, 120
        %v1506 = vpop.permute.xlu0 %1505
        %1507 = vrot.lane.b32.xlu0 %v1397, 120
        %v1508 = vpop.permute.xlu0 %1507
        %1509 = vrot.lane.b32.xlu0 %v1398, 120
        %v1510 = vpop.permute.xlu0 %1509
        %1511 = vrot.lane.b32.xlu0 %v1399, 120
        %v1512 = vpop.permute.xlu0 %1511
        %v1529 = vmul.f32 %v1449, %v1482
        %v1530 = vmul.f32 %v1450, %v1484
        %v1531 = vmul.f32 %v1451, %v1486
        %v1532 = vmul.f32 %v1452, %v1488
        %v1533 = vmul.f32 %v1453, %v1490
        %v1534 = vmul.f32 %v1454, %v1492
        %v1535 = vmul.f32 %v1455, %v1494
        %v1536 = vmul.f32 %v1456, %v1496
        %v1537 = vmul.f32 %v1457, %v1498
        %v1538 = vmul.f32 %v1458, %v1500
        %v1539 = vmul.f32 %v1459, %v1502
        %v1540 = vmul.f32 %v1460, %v1504
        %v1541 = vmul.f32 %v1461, %v1506
        %v1542 = vmul.f32 %v1462, %v1508
        %v1543 = vmul.f32 %v1463, %v1510
        %v1544 = vmul.f32 %v1464, %v1512
        %v1545 = vadd.f32 %v1210, %v1529
        %v1546 = vadd.f32 %v1215, %v1530
        %v1547 = vadd.f32 %v1220, %v1531
        %v1548 = vadd.f32 %v1225, %v1532
        %v1549 = vadd.f32 %v1230, %v1533
        %v1550 = vadd.f32 %v1235, %v1534
        %v1551 = vadd.f32 %v1240, %v1535
        %v1552 = vadd.f32 %v1245, %v1536
        %v1553 = vadd.f32 %v1250, %v1537
        %v1554 = vadd.f32 %v1255, %v1538
        %v1555 = vadd.f32 %v1260, %v1539
        %v1556 = vadd.f32 %v1265, %v1540
        %v1557 = vadd.f32 %v1270, %v1541
        %v1558 = vadd.f32 %v1275, %v1542
        %v1559 = vadd.f32 %v1280, %v1543
        %v1560 = vadd.f32 %v1285, %v1544
        %v1561 = vld [vmem:[%s13] sm:$0xff]
        %v1562 = vld [vmem:[%s14] sm:$0x1]
        %v1564 = vlaneseq
        %v1565 = vshrl.u32 %v1564, 7
        %v1566 = vsub.s32 0, %v1565
        %v1567 = vrot.slane %v1562, %v1566
        %vm1569 = vcmask 64512
        %v1571 = vsel %vm1569, %v1545, 0
        %v1574 = vsel %vm1569, %v1546, 0
        %v1577 = vsel %vm1569, %v1547, 0
        %v1580 = vsel %vm1569, %v1548, 0
        %v1583 = vsel %vm1569, %v1549, 0
        %v1586 = vsel %vm1569, %v1550, 0
        %v1589 = vsel %vm1569, %v1551, 0
        %v1592 = vsel %vm1569, %v1552, 0
        %v1595 = vsel %vm1569, %v1553, 0
        %v1598 = vsel %vm1569, %v1554, 0
        %v1601 = vsel %vm1569, %v1555, 0
        %v1604 = vsel %vm1569, %v1556, 0
        %v1607 = vsel %vm1569, %v1557, 0
        %v1610 = vsel %vm1569, %v1558, 0
        %v1613 = vsel %vm1569, %v1559, 0
        %v1616 = vsel %vm1569, %v1560, 0
        %1618 = vmatprep.subr.mxu0 0.0
        %1619 = vmatpush1.msra.mxu0 0.0
        %1620 = vmatprep.subr.mxu0 0.0
        %1621 = vmatpush1.msra.mxu0 0.0
        %1622 = vmatprep.subr.mxu0 0.0
        %1623 = vmatpush1.msra.mxu0 0.0
        %1624 = vmatprep.subr.mxu0 0.0
        %1625 = vmatpush1.msra.mxu0 0.0
        %1626 = vmatprep.subr.mxu0 0.0
        %1627 = vmatpush1.msra.mxu0 0.0
        %1628 = vmatprep.subr.mxu0 0.0
        %1629 = vmatpush1.msra.mxu0 0.0
        %1630 = vmatprep.subr.mxu0 0.0
        %1631 = vmatpush1.msra.mxu0 0.0
        %1632 = vmatprep.subr.mxu0 0.0
        %1633 = vmatpush1.msra.mxu0 0.0
        %1634 = vmatprep.subr.mxu0 0.0
        %1635 = vmatpush1.msra.mxu0 0.0
        %1636 = vmatprep.subr.mxu0 0.0
        %1637 = vmatpush1.msra.mxu0 0.0
        %1638 = vmatprep.subr.mxu0 0.0
        %1639 = vmatpush1.msra.mxu0 0.0
        %1640 = vmatprep.subr.mxu0 0.0
        %1641 = vmatpush1.msra.mxu0 0.0
        %1642 = vmatprep.subr.mxu0 0.0
        %1643 = vmatpush1.msra.mxu0 0.0
        %1644 = vmatprep.subr.mxu0 0.0
        %1645 = vmatpush1.msra.mxu0 0.0
        %1646 = vmatprep.subr.mxu0 0.0
        %1647 = vmatpush1.msra.mxu0 0.0
        %1648 = vmatprep.subr.mxu0 0.0
        %1649 = vmatpush1.msra.mxu0 %v1561
        %1650 = vmatprep.subr.mxu0 0.0
        %1651 = vmatpush2.msra.mxu0 0.0
        %1652 = vmatprep.subr.mxu0 0.0
        %1653 = vmatpush2.msra.mxu0 0.0
        %1654 = vmatprep.subr.mxu0 0.0
        %1655 = vmatpush2.msra.mxu0 0.0
        %1656 = vmatprep.subr.mxu0 0.0
        %1657 = vmatpush2.msra.mxu0 0.0
        %1658 = vmatprep.subr.mxu0 0.0
        %1659 = vmatpush2.msra.mxu0 0.0
        %1660 = vmatprep.subr.mxu0 0.0
        %1661 = vmatpush2.msra.mxu0 0.0
        %1662 = vmatprep.subr.mxu0 0.0
        %1663 = vmatpush2.msra.mxu0 0.0
        %1664 = vmatprep.subr.mxu0 0.0
        %1665 = vmatpush2.msra.mxu0 0.0
        %1666 = vmatprep.subr.mxu0 0.0
        %1667 = vmatpush2.msra.mxu0 0.0
        %1668 = vmatprep.subr.mxu0 0.0
        %1669 = vmatpush2.msra.mxu0 0.0
        %1670 = vmatprep.subr.mxu0 0.0
        %1671 = vmatpush2.msra.mxu0 0.0
        %1672 = vmatprep.subr.mxu0 0.0
        %1673 = vmatpush2.msra.mxu0 0.0
        %1674 = vmatprep.subr.mxu0 0.0
        %1675 = vmatpush2.msra.mxu0 0.0
        %1676 = vmatprep.subr.mxu0 0.0
        %1677 = vmatpush2.msra.mxu0 0.0
        %1678 = vmatprep.subr.mxu0 0.0
        %1679 = vmatpush2.msra.mxu0 0.0
        %1680 = vmatprep.subr.mxu0 0.0
        %1681 = vmatpush2.msra.mxu0 0.0
        %1682 = vmatprep.mubr.f32.mxu0 0.0
        %1683 = vmatmul.mubr.f32.gmra.mxu0 %v1571
        %v1684 = vpop.f32.mrf.mxu0
        %v1685 = vadd.f32 %v1567, %v1684
        %v1686 = vpop.f32.mrf.mxu0
        %1687 = vmatprep.mubr.f32.mxu0 0.0
        %1688 = vmatmul.mubr.f32.gmra.mxu0 %v1574
        %v1689 = vpop.f32.mrf.mxu0
        %v1690 = vadd.f32 %v1567, %v1689
        %v1691 = vpop.f32.mrf.mxu0
        %1692 = vmatprep.mubr.f32.mxu0 0.0
        %1693 = vmatmul.mubr.f32.gmra.mxu0 %v1577
        %v1694 = vpop.f32.mrf.mxu0
        %v1695 = vadd.f32 %v1567, %v1694
        %v1696 = vpop.f32.mrf.mxu0
        %1697 = vmatprep.mubr.f32.mxu0 0.0
        %1698 = vmatmul.mubr.f32.gmra.mxu0 %v1580
        %v1699 = vpop.f32.mrf.mxu0
        %v1700 = vadd.f32 %v1567, %v1699
        %v1701 = vpop.f32.mrf.mxu0
        %1702 = vmatprep.mubr.f32.mxu0 0.0
        %1703 = vmatmul.mubr.f32.gmra.mxu0 %v1583
        %v1704 = vpop.f32.mrf.mxu0
        %v1705 = vadd.f32 %v1567, %v1704
        %v1706 = vpop.f32.mrf.mxu0
        %1707 = vmatprep.mubr.f32.mxu0 0.0
        %1708 = vmatmul.mubr.f32.gmra.mxu0 %v1586
        %v1709 = vpop.f32.mrf.mxu0
        %v1710 = vadd.f32 %v1567, %v1709
        %v1711 = vpop.f32.mrf.mxu0
        %1712 = vmatprep.mubr.f32.mxu0 0.0
        %1713 = vmatmul.mubr.f32.gmra.mxu0 %v1589
        %v1714 = vpop.f32.mrf.mxu0
        %v1715 = vadd.f32 %v1567, %v1714
        %v1716 = vpop.f32.mrf.mxu0
        %1717 = vmatprep.mubr.f32.mxu0 0.0
        %1718 = vmatmul.mubr.f32.gmra.mxu0 %v1592
        %v1719 = vpop.f32.mrf.mxu0
        %v1720 = vadd.f32 %v1567, %v1719
        %v1721 = vpop.f32.mrf.mxu0
        %1722 = vmatprep.mubr.f32.mxu0 0.0
        %1723 = vmatmul.mubr.f32.gmra.mxu0 %v1595
        %v1724 = vpop.f32.mrf.mxu0
        %v1725 = vadd.f32 %v1567, %v1724
        %v1726 = vpop.f32.mrf.mxu0
        %1727 = vmatprep.mubr.f32.mxu0 0.0
        %1728 = vmatmul.mubr.f32.gmra.mxu0 %v1598
        %v1729 = vpop.f32.mrf.mxu0
        %v1730 = vadd.f32 %v1567, %v1729
        %v1731 = vpop.f32.mrf.mxu0
        %1732 = vmatprep.mubr.f32.mxu0 0.0
        %1733 = vmatmul.mubr.f32.gmra.mxu0 %v1601
        %v1734 = vpop.f32.mrf.mxu0
        %v1735 = vadd.f32 %v1567, %v1734
        %v1736 = vpop.f32.mrf.mxu0
        %1737 = vmatprep.mubr.f32.mxu0 0.0
        %1738 = vmatmul.mubr.f32.gmra.mxu0 %v1604
        %v1739 = vpop.f32.mrf.mxu0
        %v1740 = vadd.f32 %v1567, %v1739
        %v1741 = vpop.f32.mrf.mxu0
        %1742 = vmatprep.mubr.f32.mxu0 0.0
        %1743 = vmatmul.mubr.f32.gmra.mxu0 %v1607
        %v1744 = vpop.f32.mrf.mxu0
        %v1745 = vadd.f32 %v1567, %v1744
        %v1746 = vpop.f32.mrf.mxu0
        %1747 = vmatprep.mubr.f32.mxu0 0.0
        %1748 = vmatmul.mubr.f32.gmra.mxu0 %v1610
        %v1749 = vpop.f32.mrf.mxu0
        %v1750 = vadd.f32 %v1567, %v1749
        %v1751 = vpop.f32.mrf.mxu0
        %1752 = vmatprep.mubr.f32.mxu0 0.0
        %1753 = vmatmul.mubr.f32.gmra.mxu0 %v1613
        %v1754 = vpop.f32.mrf.mxu0
        %v1755 = vadd.f32 %v1567, %v1754
        %v1756 = vpop.f32.mrf.mxu0
        %1757 = vmatprep.mubr.f32.mxu0 0.0
        %1758 = vmatmul.mubr.f32.gmra.mxu0 %v1616
        %v1759 = vpop.f32.mrf.mxu0
        %v1760 = vadd.f32 %v1567, %v1759
        %v1761 = vpop.f32.mrf.mxu0
        %1762 = vdwg.mxu0
        %v1763 = vmax.f32 %v1685, 0.0
        %v1764 = vmax.f32 %v1690, 0.0
        %v1765 = vmax.f32 %v1695, 0.0
        %v1766 = vmax.f32 %v1700, 0.0
        %v1767 = vmax.f32 %v1705, 0.0
        %v1768 = vmax.f32 %v1710, 0.0
        %v1769 = vmax.f32 %v1715, 0.0
        %v1770 = vmax.f32 %v1720, 0.0
        %v1771 = vmax.f32 %v1725, 0.0
        %v1772 = vmax.f32 %v1730, 0.0
        %v1773 = vmax.f32 %v1735, 0.0
        %v1774 = vmax.f32 %v1740, 0.0
        %v1775 = vmax.f32 %v1745, 0.0
        %v1776 = vmax.f32 %v1750, 0.0
        %v1777 = vmax.f32 %v1755, 0.0
        %v1778 = vmax.f32 %v1760, 0.0
        %v1779 = vld [vmem:[%s15] sm:$0xff]
        %v1780 = vld [vmem:[%s15 + $0x8] sm:$0xff]
        %v1781 = vld [vmem:[%s15 + $0x10] sm:$0xff]
        %v1782 = vld [vmem:[%s15 + $0x18] sm:$0xff]
        %v1783 = vld [vmem:[%s16] sm:$0x1]
        %v1785 = vlaneseq
        %v1786 = vshrl.u32 %v1785, 7
        %v1787 = vsub.s32 0, %v1786
        %v1788 = vrot.slane %v1783, %v1787
        %v1791 = vsel %vm874, %v1763, 0
        %v1794 = vsel %vm874, %v1764, 0
        %v1797 = vsel %vm874, %v1765, 0
        %v1800 = vsel %vm874, %v1766, 0
        %v1803 = vsel %vm874, %v1767, 0
        %v1806 = vsel %vm874, %v1768, 0
        %v1809 = vsel %vm874, %v1769, 0
        %v1812 = vsel %vm874, %v1770, 0
        %v1815 = vsel %vm874, %v1771, 0
        %v1818 = vsel %vm874, %v1772, 0
        %v1821 = vsel %vm874, %v1773, 0
        %v1824 = vsel %vm874, %v1774, 0
        %v1827 = vsel %vm874, %v1775, 0
        %v1830 = vsel %vm874, %v1776, 0
        %v1833 = vsel %vm874, %v1777, 0
        %v1836 = vsel %vm874, %v1778, 0
        %1838 = vmatprep.subr.mxu0 0.0
        %1839 = vmatpush1.msra.mxu0 0.0
        %1840 = vmatprep.subr.mxu0 0.0
        %1841 = vmatpush1.msra.mxu0 0.0
        %1842 = vmatprep.subr.mxu0 0.0
        %1843 = vmatpush1.msra.mxu0 0.0
        %1844 = vmatprep.subr.mxu0 0.0
        %1845 = vmatpush1.msra.mxu0 0.0
        %1846 = vmatprep.subr.mxu0 0.0
        %1847 = vmatpush1.msra.mxu0 0.0
        %1848 = vmatprep.subr.mxu0 0.0
        %1849 = vmatpush1.msra.mxu0 0.0
        %1850 = vmatprep.subr.mxu0 0.0
        %1851 = vmatpush1.msra.mxu0 0.0
        %1852 = vmatprep.subr.mxu0 0.0
        %1853 = vmatpush1.msra.mxu0 0.0
        %1854 = vmatprep.subr.mxu0 0.0
        %1855 = vmatpush1.msra.mxu0 0.0
        %1856 = vmatprep.subr.mxu0 0.0
        %1857 = vmatpush1.msra.mxu0 0.0
        %1858 = vmatprep.subr.mxu0 0.0
        %1859 = vmatpush1.msra.mxu0 0.0
        %1860 = vmatprep.subr.mxu0 0.0
        %1861 = vmatpush1.msra.mxu0 0.0
        %1862 = vmatprep.subr.mxu0 0.0
        %1863 = vmatpush1.msra.mxu0 %v1782
        %1864 = vmatprep.subr.mxu0 0.0
        %1865 = vmatpush1.msra.mxu0 %v1781
        %1866 = vmatprep.subr.mxu0 0.0
        %1867 = vmatpush1.msra.mxu0 %v1780
        %1868 = vmatprep.subr.mxu0 0.0
        %1869 = vmatpush1.msra.mxu0 %v1779
        %1870 = vmatprep.subr.mxu0 0.0
        %1871 = vmatpush2.msra.mxu0 0.0
        %1872 = vmatprep.subr.mxu0 0.0
        %1873 = vmatpush2.msra.mxu0 0.0
        %1874 = vmatprep.subr.mxu0 0.0
        %1875 = vmatpush2.msra.mxu0 0.0
        %1876 = vmatprep.subr.mxu0 0.0
        %1877 = vmatpush2.msra.mxu0 0.0
        %1878 = vmatprep.subr.mxu0 0.0
        %1879 = vmatpush2.msra.mxu0 0.0
        %1880 = vmatprep.subr.mxu0 0.0
        %1881 = vmatpush2.msra.mxu0 0.0
        %1882 = vmatprep.subr.mxu0 0.0
        %1883 = vmatpush2.msra.mxu0 0.0
        %1884 = vmatprep.subr.mxu0 0.0
        %1885 = vmatpush2.msra.mxu0 0.0
        %1886 = vmatprep.subr.mxu0 0.0
        %1887 = vmatpush2.msra.mxu0 0.0
        %1888 = vmatprep.subr.mxu0 0.0
        %1889 = vmatpush2.msra.mxu0 0.0
        %1890 = vmatprep.subr.mxu0 0.0
        %1891 = vmatpush2.msra.mxu0 0.0
        %1892 = vmatprep.subr.mxu0 0.0
        %1893 = vmatpush2.msra.mxu0 0.0
        %1894 = vmatprep.subr.mxu0 0.0
        %1895 = vmatpush2.msra.mxu0 0.0
        %1896 = vmatprep.subr.mxu0 0.0
        %1897 = vmatpush2.msra.mxu0 0.0
        %1898 = vmatprep.subr.mxu0 0.0
        %1899 = vmatpush2.msra.mxu0 0.0
        %1900 = vmatprep.subr.mxu0 0.0
        %1901 = vmatpush2.msra.mxu0 0.0
        %1902 = vmatprep.mubr.f32.mxu0 0.0
        %1903 = vmatmul.mubr.f32.gmra.mxu0 %v1791
        %v1904 = vpop.f32.mrf.mxu0
        %v1905 = vadd.f32 %v1788, %v1904
        %v1906 = vpop.f32.mrf.mxu0
        %1907 = vmatprep.mubr.f32.mxu0 0.0
        %1908 = vmatmul.mubr.f32.gmra.mxu0 %v1794
        %v1909 = vpop.f32.mrf.mxu0
        %v1910 = vadd.f32 %v1788, %v1909
        %v1911 = vpop.f32.mrf.mxu0
        %1912 = vmatprep.mubr.f32.mxu0 0.0
        %1913 = vmatmul.mubr.f32.gmra.mxu0 %v1797
        %v1914 = vpop.f32.mrf.mxu0
        %v1915 = vadd.f32 %v1788, %v1914
        %v1916 = vpop.f32.mrf.mxu0
        %1917 = vmatprep.mubr.f32.mxu0 0.0
        %1918 = vmatmul.mubr.f32.gmra.mxu0 %v1800
        %v1919 = vpop.f32.mrf.mxu0
        %v1920 = vadd.f32 %v1788, %v1919
        %v1921 = vpop.f32.mrf.mxu0
        %1922 = vmatprep.mubr.f32.mxu0 0.0
        %1923 = vmatmul.mubr.f32.gmra.mxu0 %v1803
        %v1924 = vpop.f32.mrf.mxu0
        %v1925 = vadd.f32 %v1788, %v1924
        %v1926 = vpop.f32.mrf.mxu0
        %1927 = vmatprep.mubr.f32.mxu0 0.0
        %1928 = vmatmul.mubr.f32.gmra.mxu0 %v1806
        %v1929 = vpop.f32.mrf.mxu0
        %v1930 = vadd.f32 %v1788, %v1929
        %v1931 = vpop.f32.mrf.mxu0
        %1932 = vmatprep.mubr.f32.mxu0 0.0
        %1933 = vmatmul.mubr.f32.gmra.mxu0 %v1809
        %v1934 = vpop.f32.mrf.mxu0
        %v1935 = vadd.f32 %v1788, %v1934
        %v1936 = vpop.f32.mrf.mxu0
        %1937 = vmatprep.mubr.f32.mxu0 0.0
        %1938 = vmatmul.mubr.f32.gmra.mxu0 %v1812
        %v1939 = vpop.f32.mrf.mxu0
        %v1940 = vadd.f32 %v1788, %v1939
        %v1941 = vpop.f32.mrf.mxu0
        %1942 = vmatprep.mubr.f32.mxu0 0.0
        %1943 = vmatmul.mubr.f32.gmra.mxu0 %v1815
        %v1944 = vpop.f32.mrf.mxu0
        %v1945 = vadd.f32 %v1788, %v1944
        %v1946 = vpop.f32.mrf.mxu0
        %1947 = vmatprep.mubr.f32.mxu0 0.0
        %1948 = vmatmul.mubr.f32.gmra.mxu0 %v1818
        %v1949 = vpop.f32.mrf.mxu0
        %v1950 = vadd.f32 %v1788, %v1949
        %v1951 = vpop.f32.mrf.mxu0
        %1952 = vmatprep.mubr.f32.mxu0 0.0
        %1953 = vmatmul.mubr.f32.gmra.mxu0 %v1821
        %v1954 = vpop.f32.mrf.mxu0
        %v1955 = vadd.f32 %v1788, %v1954
        %v1956 = vpop.f32.mrf.mxu0
        %1957 = vmatprep.mubr.f32.mxu0 0.0
        %1958 = vmatmul.mubr.f32.gmra.mxu0 %v1824
        %v1959 = vpop.f32.mrf.mxu0
        %v1960 = vadd.f32 %v1788, %v1959
        %v1961 = vpop.f32.mrf.mxu0
        %1962 = vmatprep.mubr.f32.mxu0 0.0
        %1963 = vmatmul.mubr.f32.gmra.mxu0 %v1827
        %v1964 = vpop.f32.mrf.mxu0
        %v1965 = vadd.f32 %v1788, %v1964
        %v1966 = vpop.f32.mrf.mxu0
        %1967 = vmatprep.mubr.f32.mxu0 0.0
        %1968 = vmatmul.mubr.f32.gmra.mxu0 %v1830
        %v1969 = vpop.f32.mrf.mxu0
        %v1970 = vadd.f32 %v1788, %v1969
        %v1971 = vpop.f32.mrf.mxu0
        %1972 = vmatprep.mubr.f32.mxu0 0.0
        %1973 = vmatmul.mubr.f32.gmra.mxu0 %v1833
        %v1974 = vpop.f32.mrf.mxu0
        %v1975 = vadd.f32 %v1788, %v1974
        %v1976 = vpop.f32.mrf.mxu0
        %1977 = vmatprep.mubr.f32.mxu0 0.0
        %1978 = vmatmul.mubr.f32.gmra.mxu0 %v1836
        %v1979 = vpop.f32.mrf.mxu0
        %v1980 = vadd.f32 %v1788, %v1979
        %v1981 = vpop.f32.mrf.mxu0
        %1982 = vdwg.mxu0
        %v1983 = vmax.f32 %v1905, 0.0
        %v1984 = vmax.f32 %v1910, 0.0
        %v1985 = vmax.f32 %v1915, 0.0
        %v1986 = vmax.f32 %v1920, 0.0
        %v1987 = vmax.f32 %v1925, 0.0
        %v1988 = vmax.f32 %v1930, 0.0
        %v1989 = vmax.f32 %v1935, 0.0
        %v1990 = vmax.f32 %v1940, 0.0
        %v1991 = vmax.f32 %v1945, 0.0
        %v1992 = vmax.f32 %v1950, 0.0
        %v1993 = vmax.f32 %v1955, 0.0
        %v1994 = vmax.f32 %v1960, 0.0
        %v1995 = vmax.f32 %v1965, 0.0
        %v1996 = vmax.f32 %v1970, 0.0
        %v1997 = vmax.f32 %v1975, 0.0
        %v1998 = vmax.f32 %v1980, 0.0
        %v1999 = vld [vmem:[%s17] sm:$0xff]
        %v2000 = vld [vmem:[%s17 + $0x8] sm:$0xff]
        %v2001 = vld [vmem:[%s17 + $0x10] sm:$0xff]
        %v2002 = vld [vmem:[%s17 + $0x18] sm:$0xff]
        %v2003 = vld [vmem:[%s18] sm:$0x1]
        %v2005 = vlaneseq
        %v2006 = vshrl.u32 %v2005, 7
        %v2007 = vsub.s32 0, %v2006
        %v2008 = vrot.slane %v2003, %v2007
        %v2011 = vsel %vm874, %v1983, 0
        %v2014 = vsel %vm874, %v1984, 0
        %v2017 = vsel %vm874, %v1985, 0
        %v2020 = vsel %vm874, %v1986, 0
        %v2023 = vsel %vm874, %v1987, 0
        %v2026 = vsel %vm874, %v1988, 0
        %v2029 = vsel %vm874, %v1989, 0
        %v2032 = vsel %vm874, %v1990, 0
        %v2035 = vsel %vm874, %v1991, 0
        %v2038 = vsel %vm874, %v1992, 0
        %v2041 = vsel %vm874, %v1993, 0
        %v2044 = vsel %vm874, %v1994, 0
        %v2047 = vsel %vm874, %v1995, 0
        %v2050 = vsel %vm874, %v1996, 0
        %v2053 = vsel %vm874, %v1997, 0
        %v2056 = vsel %vm874, %v1998, 0
        %2058 = vmatprep.subr.mxu0 0.0
        %2059 = vmatpush1.msra.mxu0 0.0
        %2060 = vmatprep.subr.mxu0 0.0
        %2061 = vmatpush1.msra.mxu0 0.0
        %2062 = vmatprep.subr.mxu0 0.0
        %2063 = vmatpush1.msra.mxu0 0.0
        %2064 = vmatprep.subr.mxu0 0.0
        %2065 = vmatpush1.msra.mxu0 0.0
        %2066 = vmatprep.subr.mxu0 0.0
        %2067 = vmatpush1.msra.mxu0 0.0
        %2068 = vmatprep.subr.mxu0 0.0
        %2069 = vmatpush1.msra.mxu0 0.0
        %2070 = vmatprep.subr.mxu0 0.0
        %2071 = vmatpush1.msra.mxu0 0.0
        %2072 = vmatprep.subr.mxu0 0.0
        %2073 = vmatpush1.msra.mxu0 0.0
        %2074 = vmatprep.subr.mxu0 0.0
        %2075 = vmatpush1.msra.mxu0 0.0
        %2076 = vmatprep.subr.mxu0 0.0
        %2077 = vmatpush1.msra.mxu0 0.0
        %2078 = vmatprep.subr.mxu0 0.0
        %2079 = vmatpush1.msra.mxu0 0.0
        %2080 = vmatprep.subr.mxu0 0.0
        %2081 = vmatpush1.msra.mxu0 0.0
        %2082 = vmatprep.subr.mxu0 0.0
        %2083 = vmatpush1.msra.mxu0 %v2002
        %2084 = vmatprep.subr.mxu0 0.0
        %2085 = vmatpush1.msra.mxu0 %v2001
        %2086 = vmatprep.subr.mxu0 0.0
        %2087 = vmatpush1.msra.mxu0 %v2000
        %2088 = vmatprep.subr.mxu0 0.0
        %2089 = vmatpush1.msra.mxu0 %v1999
        %2090 = vmatprep.subr.mxu0 0.0
        %2091 = vmatpush2.msra.mxu0 0.0
        %2092 = vmatprep.subr.mxu0 0.0
        %2093 = vmatpush2.msra.mxu0 0.0
        %2094 = vmatprep.subr.mxu0 0.0
        %2095 = vmatpush2.msra.mxu0 0.0
        %2096 = vmatprep.subr.mxu0 0.0
        %2097 = vmatpush2.msra.mxu0 0.0
        %2098 = vmatprep.subr.mxu0 0.0
        %2099 = vmatpush2.msra.mxu0 0.0
        %2100 = vmatprep.subr.mxu0 0.0
        %2101 = vmatpush2.msra.mxu0 0.0
        %2102 = vmatprep.subr.mxu0 0.0
        %2103 = vmatpush2.msra.mxu0 0.0
        %2104 = vmatprep.subr.mxu0 0.0
        %2105 = vmatpush2.msra.mxu0 0.0
        %2106 = vmatprep.subr.mxu0 0.0
        %2107 = vmatpush2.msra.mxu0 0.0
        %2108 = vmatprep.subr.mxu0 0.0
        %2109 = vmatpush2.msra.mxu0 0.0
        %2110 = vmatprep.subr.mxu0 0.0
        %2111 = vmatpush2.msra.mxu0 0.0
        %2112 = vmatprep.subr.mxu0 0.0
        %2113 = vmatpush2.msra.mxu0 0.0
        %2114 = vmatprep.subr.mxu0 0.0
        %2115 = vmatpush2.msra.mxu0 0.0
        %2116 = vmatprep.subr.mxu0 0.0
        %2117 = vmatpush2.msra.mxu0 0.0
        %2118 = vmatprep.subr.mxu0 0.0
        %2119 = vmatpush2.msra.mxu0 0.0
        %2120 = vmatprep.subr.mxu0 0.0
        %2121 = vmatpush2.msra.mxu0 0.0
        %2122 = vmatprep.mubr.f32.mxu0 0.0
        %2123 = vmatmul.mubr.f32.gmra.mxu0 %v2011
        %v2124 = vpop.f32.mrf.mxu0
        %v2125 = vadd.f32 %v2008, %v2124
        %v2126 = vpop.f32.mrf.mxu0
        %2127 = vmatprep.mubr.f32.mxu0 0.0
        %2128 = vmatmul.mubr.f32.gmra.mxu0 %v2014
        %v2129 = vpop.f32.mrf.mxu0
        %v2130 = vadd.f32 %v2008, %v2129
        %v2131 = vpop.f32.mrf.mxu0
        %2132 = vmatprep.mubr.f32.mxu0 0.0
        %2133 = vmatmul.mubr.f32.gmra.mxu0 %v2017
        %v2134 = vpop.f32.mrf.mxu0
        %v2135 = vadd.f32 %v2008, %v2134
        %v2136 = vpop.f32.mrf.mxu0
        %2137 = vmatprep.mubr.f32.mxu0 0.0
        %2138 = vmatmul.mubr.f32.gmra.mxu0 %v2020
        %v2139 = vpop.f32.mrf.mxu0
        %v2140 = vadd.f32 %v2008, %v2139
        %v2141 = vpop.f32.mrf.mxu0
        %2142 = vmatprep.mubr.f32.mxu0 0.0
        %2143 = vmatmul.mubr.f32.gmra.mxu0 %v2023
        %v2144 = vpop.f32.mrf.mxu0
        %v2145 = vadd.f32 %v2008, %v2144
        %v2146 = vpop.f32.mrf.mxu0
        %2147 = vmatprep.mubr.f32.mxu0 0.0
        %2148 = vmatmul.mubr.f32.gmra.mxu0 %v2026
        %v2149 = vpop.f32.mrf.mxu0
        %v2150 = vadd.f32 %v2008, %v2149
        %v2151 = vpop.f32.mrf.mxu0
        %2152 = vmatprep.mubr.f32.mxu0 0.0
        %2153 = vmatmul.mubr.f32.gmra.mxu0 %v2029
        %v2154 = vpop.f32.mrf.mxu0
        %v2155 = vadd.f32 %v2008, %v2154
        %v2156 = vpop.f32.mrf.mxu0
        %2157 = vmatprep.mubr.f32.mxu0 0.0
        %2158 = vmatmul.mubr.f32.gmra.mxu0 %v2032
        %v2159 = vpop.f32.mrf.mxu0
        %v2160 = vadd.f32 %v2008, %v2159
        %v2161 = vpop.f32.mrf.mxu0
        %2162 = vmatprep.mubr.f32.mxu0 0.0
        %2163 = vmatmul.mubr.f32.gmra.mxu0 %v2035
        %v2164 = vpop.f32.mrf.mxu0
        %v2165 = vadd.f32 %v2008, %v2164
        %v2166 = vpop.f32.mrf.mxu0
        %2167 = vmatprep.mubr.f32.mxu0 0.0
        %2168 = vmatmul.mubr.f32.gmra.mxu0 %v2038
        %v2169 = vpop.f32.mrf.mxu0
        %v2170 = vadd.f32 %v2008, %v2169
        %v2171 = vpop.f32.mrf.mxu0
        %2172 = vmatprep.mubr.f32.mxu0 0.0
        %2173 = vmatmul.mubr.f32.gmra.mxu0 %v2041
        %v2174 = vpop.f32.mrf.mxu0
        %v2175 = vadd.f32 %v2008, %v2174
        %v2176 = vpop.f32.mrf.mxu0
        %2177 = vmatprep.mubr.f32.mxu0 0.0
        %2178 = vmatmul.mubr.f32.gmra.mxu0 %v2044
        %v2179 = vpop.f32.mrf.mxu0
        %v2180 = vadd.f32 %v2008, %v2179
        %v2181 = vpop.f32.mrf.mxu0
        %2182 = vmatprep.mubr.f32.mxu0 0.0
        %2183 = vmatmul.mubr.f32.gmra.mxu0 %v2047
        %v2184 = vpop.f32.mrf.mxu0
        %v2185 = vadd.f32 %v2008, %v2184
        %v2186 = vpop.f32.mrf.mxu0
        %2187 = vmatprep.mubr.f32.mxu0 0.0
        %2188 = vmatmul.mubr.f32.gmra.mxu0 %v2050
        %v2189 = vpop.f32.mrf.mxu0
        %v2190 = vadd.f32 %v2008, %v2189
        %v2191 = vpop.f32.mrf.mxu0
        %2192 = vmatprep.mubr.f32.mxu0 0.0
        %2193 = vmatmul.mubr.f32.gmra.mxu0 %v2053
        %v2194 = vpop.f32.mrf.mxu0
        %v2195 = vadd.f32 %v2008, %v2194
        %v2196 = vpop.f32.mrf.mxu0
        %2197 = vmatprep.mubr.f32.mxu0 0.0
        %2198 = vmatmul.mubr.f32.gmra.mxu0 %v2056
        %v2199 = vpop.f32.mrf.mxu0
        %v2200 = vadd.f32 %v2008, %v2199
        %v2201 = vpop.f32.mrf.mxu0
        %2202 = vdwg.mxu0
        %v2203 = vlaneseq
        %v2204 = vand.u32 %v2203, 127
        %vm2205 = vcmp.gt.f32.partialorder %v2125, 0.0
        %vm2206 = vcmp.gt.f32.partialorder %v2130, 0.0
        %vm2207 = vcmp.gt.f32.partialorder %v2135, 0.0
        %vm2208 = vcmp.gt.f32.partialorder %v2140, 0.0
        %vm2209 = vcmp.gt.f32.partialorder %v2145, 0.0
        %vm2210 = vcmp.gt.f32.partialorder %v2150, 0.0
        %vm2211 = vcmp.gt.f32.partialorder %v2155, 0.0
        %vm2212 = vcmp.gt.f32.partialorder %v2160, 0.0
        %vm2213 = vcmp.gt.f32.partialorder %v2165, 0.0
        %vm2214 = vcmp.gt.f32.partialorder %v2170, 0.0
        %vm2215 = vcmp.gt.f32.partialorder %v2175, 0.0
        %vm2216 = vcmp.gt.f32.partialorder %v2180, 0.0
        %vm2217 = vcmp.gt.f32.partialorder %v2185, 0.0
        %vm2218 = vcmp.gt.f32.partialorder %v2190, 0.0
        %vm2219 = vcmp.gt.f32.partialorder %v2195, 0.0
        %vm2220 = vcmp.gt.f32.partialorder %v2200, 0.0
        %v2221 = vmul.f32 %v2125, %v2125
        %v2222 = vmul.f32 %v2130, %v2130
        %v2223 = vmul.f32 %v2135, %v2135
        %v2224 = vmul.f32 %v2140, %v2140
        %v2225 = vmul.f32 %v2145, %v2145
        %v2226 = vmul.f32 %v2150, %v2150
        %v2227 = vmul.f32 %v2155, %v2155
        %v2228 = vmul.f32 %v2160, %v2160
        %v2229 = vmul.f32 %v2165, %v2165
        %v2230 = vmul.f32 %v2170, %v2170
        %v2231 = vmul.f32 %v2175, %v2175
        %v2232 = vmul.f32 %v2180, %v2180
        %v2233 = vmul.f32 %v2185, %v2185
        %v2234 = vmul.f32 %v2190, %v2190
        %v2235 = vmul.f32 %v2195, %v2195
        %v2236 = vmul.f32 %v2200, %v2200
        %v2237 = vadd.f32 %v2221, 1.0
        %v2238 = vadd.f32 %v2222, 1.0
        %v2239 = vadd.f32 %v2223, 1.0
        %v2240 = vadd.f32 %v2224, 1.0
        %v2241 = vadd.f32 %v2225, 1.0
        %v2242 = vadd.f32 %v2226, 1.0
        %v2243 = vadd.f32 %v2227, 1.0
        %v2244 = vadd.f32 %v2228, 1.0
        %v2245 = vadd.f32 %v2229, 1.0
        %v2246 = vadd.f32 %v2230, 1.0
        %v2247 = vadd.f32 %v2231, 1.0
        %v2248 = vadd.f32 %v2232, 1.0
        %v2249 = vadd.f32 %v2233, 1.0
        %v2250 = vadd.f32 %v2234, 1.0
        %v2251 = vadd.f32 %v2235, 1.0
        %v2252 = vadd.f32 %v2236, 1.0
        %v2253 = vrsqrt.pop %v2237
        %v2254 = vrsqrt.pop %v2238
        %v2255 = vrsqrt.pop %v2239
        %v2256 = vrsqrt.pop %v2240
        %v2257 = vrsqrt.pop %v2241
        %v2258 = vrsqrt.pop %v2242
        %v2259 = vrsqrt.pop %v2243
        %v2260 = vrsqrt.pop %v2244
        %v2261 = vrsqrt.pop %v2245
        %v2262 = vrsqrt.pop %v2246
        %v2263 = vrsqrt.pop %v2247
        %v2264 = vrsqrt.pop %v2248
        %v2265 = vrsqrt.pop %v2249
        %v2266 = vrsqrt.pop %v2250
        %v2267 = vrsqrt.pop %v2251
        %v2268 = vrsqrt.pop %v2252
        %v2269 = vmul.f32 %v2125, %v2253
        %v2270 = vmul.f32 %v2130, %v2254
        %v2271 = vmul.f32 %v2135, %v2255
        %v2272 = vmul.f32 %v2140, %v2256
        %v2273 = vmul.f32 %v2145, %v2257
        %v2274 = vmul.f32 %v2150, %v2258
        %v2275 = vmul.f32 %v2155, %v2259
        %v2276 = vmul.f32 %v2160, %v2260
        %v2277 = vmul.f32 %v2165, %v2261
        %v2278 = vmul.f32 %v2170, %v2262
        %v2279 = vmul.f32 %v2175, %v2263
        %v2280 = vmul.f32 %v2180, %v2264
        %v2281 = vmul.f32 %v2185, %v2265
        %v2282 = vmul.f32 %v2190, %v2266
        %v2283 = vmul.f32 %v2195, %v2267
        %v2284 = vmul.f32 %v2200, %v2268
        %v2285 = vsel %vm2205, %v2125, %v2269
        %v2286 = vsel %vm2206, %v2130, %v2270
        %v2287 = vsel %vm2207, %v2135, %v2271
        %v2288 = vsel %vm2208, %v2140, %v2272
        %v2289 = vsel %vm2209, %v2145, %v2273
        %v2290 = vsel %vm2210, %v2150, %v2274
        %v2291 = vsel %vm2211, %v2155, %v2275
        %v2292 = vsel %vm2212, %v2160, %v2276
        %v2293 = vsel %vm2213, %v2165, %v2277
        %v2294 = vsel %vm2214, %v2170, %v2278
        %v2295 = vsel %vm2215, %v2175, %v2279
        %v2296 = vsel %vm2216, %v2180, %v2280
        %v2297 = vsel %vm2217, %v2185, %v2281
        %v2298 = vsel %vm2218, %v2190, %v2282
        %v2299 = vsel %vm2219, %v2195, %v2283
        %v2300 = vsel %vm2220, %v2200, %v2284
        %v2301 = vadd.f32 %v2285, 1.005
        %v2302 = vadd.f32 %v2286, 1.005
        %v2303 = vadd.f32 %v2287, 1.005
        %v2304 = vadd.f32 %v2288, 1.005
        %v2305 = vadd.f32 %v2289, 1.005
        %v2306 = vadd.f32 %v2290, 1.005
        %v2307 = vadd.f32 %v2291, 1.005
        %v2308 = vadd.f32 %v2292, 1.005
        %v2309 = vadd.f32 %v2293, 1.005
        %v2310 = vadd.f32 %v2294, 1.005
        %v2311 = vadd.f32 %v2295, 1.005
        %v2312 = vadd.f32 %v2296, 1.005
        %v2313 = vadd.f32 %v2297, 1.005
        %v2314 = vadd.f32 %v2298, 1.005
        %v2315 = vadd.f32 %v2299, 1.005
        %v2316 = vadd.f32 %v2300, 1.005
        %v2317 = vtanh.pop %v2125
        %v2318 = vtanh.pop %v2130
        %v2319 = vtanh.pop %v2135
        %v2320 = vtanh.pop %v2140
        %v2321 = vtanh.pop %v2145
        %v2322 = vtanh.pop %v2150
        %v2323 = vtanh.pop %v2155
        %v2324 = vtanh.pop %v2160
        %v2325 = vtanh.pop %v2165
        %v2326 = vtanh.pop %v2170
        %v2327 = vtanh.pop %v2175
        %v2328 = vtanh.pop %v2180
        %v2329 = vtanh.pop %v2185
        %v2330 = vtanh.pop %v2190
        %v2331 = vtanh.pop %v2195
        %v2332 = vtanh.pop %v2200
        %v2333 = vmul.f32 %v2317, 0.999
        %v2334 = vmul.f32 %v2318, 0.999
        %v2335 = vmul.f32 %v2319, 0.999
        %v2336 = vmul.f32 %v2320, 0.999
        %v2337 = vmul.f32 %v2321, 0.999
        %v2338 = vmul.f32 %v2322, 0.999
        %v2339 = vmul.f32 %v2323, 0.999
        %v2340 = vmul.f32 %v2324, 0.999
        %v2341 = vmul.f32 %v2325, 0.999
        %v2342 = vmul.f32 %v2326, 0.999
        %v2343 = vmul.f32 %v2327, 0.999
        %v2344 = vmul.f32 %v2328, 0.999
        %v2345 = vmul.f32 %v2329, 0.999
        %v2346 = vmul.f32 %v2330, 0.999
        %v2347 = vmul.f32 %v2331, 0.999
        %v2348 = vmul.f32 %v2332, 0.999
        %v2349 = vadd.f32 %v2333, 1.0
        %v2350 = vadd.f32 %v2334, 1.0
        %v2351 = vadd.f32 %v2335, 1.0
        %v2352 = vadd.f32 %v2336, 1.0
        %v2353 = vadd.f32 %v2337, 1.0
        %v2354 = vadd.f32 %v2338, 1.0
        %v2355 = vadd.f32 %v2339, 1.0
        %v2356 = vadd.f32 %v2340, 1.0
        %v2357 = vadd.f32 %v2341, 1.0
        %v2358 = vadd.f32 %v2342, 1.0
        %v2359 = vadd.f32 %v2343, 1.0
        %v2360 = vadd.f32 %v2344, 1.0
        %v2361 = vadd.f32 %v2345, 1.0
        %v2362 = vadd.f32 %v2346, 1.0
        %v2363 = vadd.f32 %v2347, 1.0
        %v2364 = vadd.f32 %v2348, 1.0
        %v2365 = vmul.f32 %v2349, 0.5
        %v2366 = vmul.f32 %v2350, 0.5
        %v2367 = vmul.f32 %v2351, 0.5
        %v2368 = vmul.f32 %v2352, 0.5
        %v2369 = vmul.f32 %v2353, 0.5
        %v2370 = vmul.f32 %v2354, 0.5
        %v2371 = vmul.f32 %v2355, 0.5
        %v2372 = vmul.f32 %v2356, 0.5
        %v2373 = vmul.f32 %v2357, 0.5
        %v2374 = vmul.f32 %v2358, 0.5
        %v2375 = vmul.f32 %v2359, 0.5
        %v2376 = vmul.f32 %v2360, 0.5
        %v2377 = vmul.f32 %v2361, 0.5
        %v2378 = vmul.f32 %v2362, 0.5
        %v2379 = vmul.f32 %v2363, 0.5
        %v2380 = vmul.f32 %v2364, 0.5
        %vm2381 = vcmp.lt.s32.totalorder %v2204, 16
        %vm2382 = vcmp.lt.s32.totalorder %v2204, 26
        %v2383 = vsel %vm2382, %v2301, %v2365
        %v2384 = vsel %vm2382, %v2302, %v2366
        %v2385 = vsel %vm2382, %v2303, %v2367
        %v2386 = vsel %vm2382, %v2304, %v2368
        %v2387 = vsel %vm2382, %v2305, %v2369
        %v2388 = vsel %vm2382, %v2306, %v2370
        %v2389 = vsel %vm2382, %v2307, %v2371
        %v2390 = vsel %vm2382, %v2308, %v2372
        %v2391 = vsel %vm2382, %v2309, %v2373
        %v2392 = vsel %vm2382, %v2310, %v2374
        %v2393 = vsel %vm2382, %v2311, %v2375
        %v2394 = vsel %vm2382, %v2312, %v2376
        %v2395 = vsel %vm2382, %v2313, %v2377
        %v2396 = vsel %vm2382, %v2314, %v2378
        %v2397 = vsel %vm2382, %v2315, %v2379
        %v2398 = vsel %vm2382, %v2316, %v2380
        %v2399 = vsel %vm2381, %v2125, %v2383
        %v2400 = vsel %vm2381, %v2130, %v2384
        %v2401 = vsel %vm2381, %v2135, %v2385
        %v2402 = vsel %vm2381, %v2140, %v2386
        %v2403 = vsel %vm2381, %v2145, %v2387
        %v2404 = vsel %vm2381, %v2150, %v2388
        %v2405 = vsel %vm2381, %v2155, %v2389
        %v2406 = vsel %vm2381, %v2160, %v2390
        %v2407 = vsel %vm2381, %v2165, %v2391
        %v2408 = vsel %vm2381, %v2170, %v2392
        %v2409 = vsel %vm2381, %v2175, %v2393
        %v2410 = vsel %vm2381, %v2180, %v2394
        %v2411 = vsel %vm2381, %v2185, %v2395
        %v2412 = vsel %vm2381, %v2190, %v2396
        %v2413 = vsel %vm2381, %v2195, %v2397
        %v2414 = vsel %vm2381, %v2200, %v2398
        %2431 = vrot.lane.b32.xlu0 %v1210, 36
        %v2432 = vpop.permute.xlu0 %2431
        %2433 = vrot.lane.b32.xlu0 %v1215, 36
        %v2434 = vpop.permute.xlu0 %2433
        %2435 = vrot.lane.b32.xlu0 %v1220, 36
        %v2436 = vpop.permute.xlu0 %2435
        %2437 = vrot.lane.b32.xlu0 %v1225, 36
        %v2438 = vpop.permute.xlu0 %2437
        %2439 = vrot.lane.b32.xlu0 %v1230, 36
        %v2440 = vpop.permute.xlu0 %2439
        %2441 = vrot.lane.b32.xlu0 %v1235, 36
        %v2442 = vpop.permute.xlu0 %2441
        %2443 = vrot.lane.b32.xlu0 %v1240, 36
        %v2444 = vpop.permute.xlu0 %2443
        %2445 = vrot.lane.b32.xlu0 %v1245, 36
        %v2446 = vpop.permute.xlu0 %2445
        %2447 = vrot.lane.b32.xlu0 %v1250, 36
        %v2448 = vpop.permute.xlu0 %2447
        %2449 = vrot.lane.b32.xlu0 %v1255, 36
        %v2450 = vpop.permute.xlu0 %2449
        %2451 = vrot.lane.b32.xlu0 %v1260, 36
        %v2452 = vpop.permute.xlu0 %2451
        %2453 = vrot.lane.b32.xlu0 %v1265, 36
        %v2454 = vpop.permute.xlu0 %2453
        %2455 = vrot.lane.b32.xlu0 %v1270, 36
        %v2456 = vpop.permute.xlu0 %2455
        %2457 = vrot.lane.b32.xlu0 %v1275, 36
        %v2458 = vpop.permute.xlu0 %2457
        %2459 = vrot.lane.b32.xlu0 %v1280, 36
        %v2460 = vpop.permute.xlu0 %2459
        %2461 = vrot.lane.b32.xlu0 %v1285, 36
        %v2462 = vpop.permute.xlu0 %2461
        %2479 = vrot.lane.b32.xlu0 %v1384, 36
        %v2480 = vpop.permute.xlu0 %2479
        %2481 = vrot.lane.b32.xlu0 %v1385, 36
        %v2482 = vpop.permute.xlu0 %2481
        %2483 = vrot.lane.b32.xlu0 %v1386, 36
        %v2484 = vpop.permute.xlu0 %2483
        %2485 = vrot.lane.b32.xlu0 %v1387, 36
        %v2486 = vpop.permute.xlu0 %2485
        %2487 = vrot.lane.b32.xlu0 %v1388, 36
        %v2488 = vpop.permute.xlu0 %2487
        %2489 = vrot.lane.b32.xlu0 %v1389, 36
        %v2490 = vpop.permute.xlu0 %2489
        %2491 = vrot.lane.b32.xlu0 %v1390, 36
        %v2492 = vpop.permute.xlu0 %2491
        %2493 = vrot.lane.b32.xlu0 %v1391, 36
        %v2494 = vpop.permute.xlu0 %2493
        %2495 = vrot.lane.b32.xlu0 %v1392, 36
        %v2496 = vpop.permute.xlu0 %2495
        %2497 = vrot.lane.b32.xlu0 %v1393, 36
        %v2498 = vpop.permute.xlu0 %2497
        %2499 = vrot.lane.b32.xlu0 %v1394, 36
        %v2500 = vpop.permute.xlu0 %2499
        %2501 = vrot.lane.b32.xlu0 %v1395, 36
        %v2502 = vpop.permute.xlu0 %2501
        %2503 = vrot.lane.b32.xlu0 %v1396, 36
        %v2504 = vpop.permute.xlu0 %2503
        %2505 = vrot.lane.b32.xlu0 %v1397, 36
        %v2506 = vpop.permute.xlu0 %2505
        %2507 = vrot.lane.b32.xlu0 %v1398, 36
        %v2508 = vpop.permute.xlu0 %2507
        %2509 = vrot.lane.b32.xlu0 %v1399, 36
        %v2510 = vpop.permute.xlu0 %2509
        %2528 = vrot.lane.b32.xlu0 %v1425, 52
        %v2529 = vpop.permute.xlu0 %2528
        %2532 = vrot.lane.b32.xlu0 %v1448, 60
        %v2533 = vpop.permute.xlu0 %2532
        %vm2535 = vcmask 293888
        %v2536 = vsel %vm2535, %v2399, %v2432
        %v2537 = vsel %vm2535, %v2400, %v2434
        %v2538 = vsel %vm2535, %v2401, %v2436
        %v2539 = vsel %vm2535, %v2402, %v2438
        %v2540 = vsel %vm2535, %v2403, %v2440
        %v2541 = vsel %vm2535, %v2404, %v2442
        %v2542 = vsel %vm2535, %v2405, %v2444
        %v2543 = vsel %vm2535, %v2406, %v2446
        %v2544 = vsel %vm2535, %v2407, %v2448
        %v2545 = vsel %vm2535, %v2408, %v2450
        %v2546 = vsel %vm2535, %v2409, %v2452
        %v2547 = vsel %vm2535, %v2410, %v2454
        %v2548 = vsel %vm2535, %v2411, %v2456
        %v2549 = vsel %vm2535, %v2412, %v2458
        %v2550 = vsel %vm2535, %v2413, %v2460
        %v2551 = vsel %vm2535, %v2414, %v2462
        %vm2552 = vcmask 359424
        %v2553 = vsel %vm2552, %v2536, %v2480
        %v2554 = vsel %vm2552, %v2537, %v2482
        %v2555 = vsel %vm2552, %v2538, %v2484
        %v2556 = vsel %vm2552, %v2539, %v2486
        %v2557 = vsel %vm2552, %v2540, %v2488
        %v2558 = vsel %vm2552, %v2541, %v2490
        %v2559 = vsel %vm2552, %v2542, %v2492
        %v2560 = vsel %vm2552, %v2543, %v2494
        %v2561 = vsel %vm2552, %v2544, %v2496
        %v2562 = vsel %vm2552, %v2545, %v2498
        %v2563 = vsel %vm2552, %v2546, %v2500
        %v2564 = vsel %vm2552, %v2547, %v2502
        %v2565 = vsel %vm2552, %v2548, %v2504
        %v2566 = vsel %vm2552, %v2549, %v2506
        %v2567 = vsel %vm2552, %v2550, %v2508
        %v2568 = vsel %vm2552, %v2551, %v2510
        %vm2569 = vcmask 424960
        %v2570 = vsel %vm2569, %v2553, %v2529
        %v2571 = vsel %vm2569, %v2554, %v2529
        %v2572 = vsel %vm2569, %v2555, %v2529
        %v2573 = vsel %vm2569, %v2556, %v2529
        %v2574 = vsel %vm2569, %v2557, %v2529
        %v2575 = vsel %vm2569, %v2558, %v2529
        %v2576 = vsel %vm2569, %v2559, %v2529
        %v2577 = vsel %vm2569, %v2560, %v2529
        %v2578 = vsel %vm2569, %v2561, %v2529
        %v2579 = vsel %vm2569, %v2562, %v2529
        %v2580 = vsel %vm2569, %v2563, %v2529
        %v2581 = vsel %vm2569, %v2564, %v2529
        %v2582 = vsel %vm2569, %v2565, %v2529
        %v2583 = vsel %vm2569, %v2566, %v2529
        %v2584 = vsel %vm2569, %v2567, %v2529
        %v2585 = vsel %vm2569, %v2568, %v2529
        %vm2586 = vcmask 490496
        %v2587 = vsel %vm2586, %v2570, %v2533
        %v2588 = vsel %vm2586, %v2571, %v2533
        %v2589 = vsel %vm2586, %v2572, %v2533
        %v2590 = vsel %vm2586, %v2573, %v2533
        %v2591 = vsel %vm2586, %v2574, %v2533
        %v2592 = vsel %vm2586, %v2575, %v2533
        %v2593 = vsel %vm2586, %v2576, %v2533
        %v2594 = vsel %vm2586, %v2577, %v2533
        %v2595 = vsel %vm2586, %v2578, %v2533
        %v2596 = vsel %vm2586, %v2579, %v2533
        %v2597 = vsel %vm2586, %v2580, %v2533
        %v2598 = vsel %vm2586, %v2581, %v2533
        %v2599 = vsel %vm2586, %v2582, %v2533
        %v2600 = vsel %vm2586, %v2583, %v2533
        %v2601 = vsel %vm2586, %v2584, %v2533
        %v2602 = vsel %vm2586, %v2585, %v2533
        %vm2603 = vcmask 556032
        %v2604 = vsel %vm2603, %v2587, 0.0
        %v2605 = vsel %vm2603, %v2588, 0.0
        %v2606 = vsel %vm2603, %v2589, 0.0
        %v2607 = vsel %vm2603, %v2590, 0.0
        %v2608 = vsel %vm2603, %v2591, 0.0
        %v2609 = vsel %vm2603, %v2592, 0.0
        %v2610 = vsel %vm2603, %v2593, 0.0
        %v2611 = vsel %vm2603, %v2594, 0.0
        %v2612 = vsel %vm2603, %v2595, 0.0
        %v2613 = vsel %vm2603, %v2596, 0.0
        %v2614 = vsel %vm2603, %v2597, 0.0
        %v2615 = vsel %vm2603, %v2598, 0.0
        %v2616 = vsel %vm2603, %v2599, 0.0
        %v2617 = vsel %vm2603, %v2600, 0.0
        %v2618 = vsel %vm2603, %v2601, 0.0
        %v2619 = vsel %vm2603, %v2602, 0.0
        %2620 = vst [vmem:[%s614] sm:$0xff] %v2604
        %2621 = vst [vmem:[%s614 + $0x8] sm:$0xff] %v2605
        %2622 = vst [vmem:[%s614 + $0x10] sm:$0xff] %v2606
        %2623 = vst [vmem:[%s614 + $0x18] sm:$0xff] %v2607
        %2624 = vst [vmem:[%s614 + $0x20] sm:$0xff] %v2608
        %2625 = vst [vmem:[%s614 + $0x28] sm:$0xff] %v2609
        %2626 = vst [vmem:[%s614 + $0x30] sm:$0xff] %v2610
        %2627 = vst [vmem:[%s614 + $0x38] sm:$0xff] %v2611
        %2628 = vst [vmem:[%s614 + $0x40] sm:$0xff] %v2612
        %2629 = vst [vmem:[%s614 + $0x48] sm:$0xff] %v2613
        %2630 = vst [vmem:[%s614 + $0x50] sm:$0xff] %v2614
        %2631 = vst [vmem:[%s614 + $0x58] sm:$0xff] %v2615
        %2632 = vst [vmem:[%s614 + $0x60] sm:$0xff] %v2616
        %2633 = vst [vmem:[%s614 + $0x68] sm:$0xff] %v2617
        %2634 = vst [vmem:[%s614 + $0x70] sm:$0xff] %v2618
        %2635 = vst [vmem:[%s614 + $0x78] sm:$0xff] %v2619
        %s2636 = sand.u32 %s452, 1
        %s2637 = scalar_lea.sflag [#allocation4], %s2636
        %s2638 = sand.u32 %s452, 1
        %s2639 = smul.addr %s2638, 128
        %s2640 = scalar_lea.vmem [#allocation3], %s2639
        // Predicated region
        $region97: #{tpu_custom_call.1} parent=95 // pred_check
          %p2641 = pneg %p462
        $region98: #{tpu_custom_call.1} parent=95 // pred_check_branch
          %2643 = sbr.rel (%p2641) target = $region100
        $region99: #{tpu_custom_call.1} parent=95 // pred_region
          %s2644 = smul.u32 16, %s35
          %s2646 = ssub.s32 2048, 2048
          %2647 = vsyncadd %s2637, %s2646
          %s2648 = smul.addr %s2644, 128
          %s2649 = scalar_lea.hbm %s19, %s2648
          %s2650 = sshll.u32 %s2640, 4
          %s2651 = int_to_ptr.vmem [resolvable:$true] %s2650
          %2656 = dma.vmem_to_hbm [thread:$0]  %s2651, 2048, %s2649, %s2637, 128, 128, 8
        $region100: #{tpu_custom_call.1} parent=95 // pred_fallthru
          _
      $region96: #{tpu_custom_call.1} parent=5 // pred_fallthru
        _
      %p2657 = scmp.le.s32.totalorder 2, %s30
      // Predicated region
      $region101: #{tpu_custom_call.1} parent=5 // pred_check
        %p2658 = pneg %p2657
      $region102: #{tpu_custom_call.1} parent=5 // pred_check_branch
        %2660 = sbr.rel (%p2658) target = $region104
      $region103: #{tpu_custom_call.1} parent=5 // pred_region
        %s2661 = ssub.s32 %s30, 2
        // Predicated region
        $region105: #{tpu_custom_call.1} parent=103 // pred_check
          %p2662 = pneg %p468
        $region106: #{tpu_custom_call.1} parent=103 // pred_check_branch
          %2664 = sbr.rel (%p2662) target = $region108
        $region107: #{tpu_custom_call.1} parent=103 // pred_region
          %s2665 = sand.u32 %s453, 1
          %s2666 = scalar_lea.sflag [#allocation4], %s2665
          %s2667 = sand.u32 %s453, 1
          %s2668 = smul.addr %s2667, 128
          %s2669 = scalar_lea.vmem [#allocation3], %s2668
          %2670 = dma.done %s2666, 2048
        $region108: #{tpu_custom_call.1} parent=103 // pred_fallthru
          _
      $region104: #{tpu_custom_call.1} parent=5 // pred_fallthru
        _
    $region6: #{tpu_custom_call.1} parent=1 // loop_footer
      %s34 = sadd.s32 1, %s30
    $region7: #{tpu_custom_call.1} parent=1 // loop_footer_branch
      %29 = sbr.rel target = $region3
    $region8: #{tpu_custom_call.1} parent=1 // loop_exit
      _
    %2671 = vsyncpa [#allocation4], 1
    %s2672 = scalar_lea.sflag [#allocation4], 1
    %2673 = vsyncpa %s2672, 1

</llo_original>
